<compile_context>
chip_gen: v6e
topology: v6e:2x2x1
jax: 0.10.0
libtpu: 0.0.40
codegen_flags: <defaults>
</compile_context>

<pallas_src>
import numpy as np

import jax
import jax.numpy as jnp
from jax.experimental import pallas as pl
from jax.experimental.pallas import tpu as pltpu

EPS = 1e-5
LANES = 128
_vmem = lambda: pl.BlockSpec(memory_space=pltpu.MemorySpace.VMEM)


# ------------------------- the single fused kernel -------------------------- #

def _make_kernel(n, sp1, sp2):
    """Builds the fused forward kernel.  sp1/sp2 are the true pooled spatial
    sizes (H*W) of the two conv blocks; counts are compile-time constants."""
    count1 = float(n * sp1)
    count2 = float(n * sp2)

    def kernel(x_ref, c1_ref, c2_ref, fcw_ref, bni_ref, rows_ref, o_ref):
        dot = lambda a, b: jnp.dot(a, b, preferred_element_type=jnp.float32)

        rows = rows_ref[...]          # (16, 128) bias/gamma/beta slab
        m = bni_ref[0]                # (128, 128) combined channel indicator
        mt = bni_ref[1]               # its transpose

        def conv_block(x, op_ref, bias, gamma, beta, count):
            # Conv2d (+ zero pad) with the 4 max-pool corner selections folded
            # in: one matmul, max over four lane-aligned 128-wide slices (VPU),
            # + corner-invariant bias, ReLU, then row-stacked BatchNorm2d with
            # training-mode batch statistics (biased variance).
            t = dot(x, op_ref[...])                                   # (N, 512)
            p = jnp.maximum(jnp.maximum(t[:, 0:128], t[:, 128:256]),
                            jnp.maximum(t[:, 256:384], t[:, 384:512])) + bias
            y = jnp.maximum(p, 0.0)
            red = jnp.concatenate([jnp.sum(y, axis=0, keepdims=True),
                                   jnp.sum(y * y, axis=0, keepdims=True)],
                                  axis=0)                             # (2, 128)
            st = dot(red, m)              # row0 = per-channel sum, row1 = sumsq
            mean = st[0:1] / count
            var = jnp.maximum(st[1:2] / count - mean * mean, 0.0)
            scale = gamma * jax.lax.rsqrt(var + EPS)
            shift = beta - mean * scale
            bc = dot(jnp.concatenate([scale, shift], axis=0), mt)     # (2, 128)
            return y * bc[0:1] + bc[1:2]

        def relu_bn1d(y, gamma, beta):
            # ReLU then BatchNorm1d over batch rows (training-mode stats);
            # per-lane stats are a cheap sublane reduction, no matmul needed.
            y = jnp.maximum(y, 0.0)
            mean = jnp.mean(y, axis=0, keepdims=True)
            var = jnp.maximum(jnp.mean(y * y, axis=0, keepdims=True)
                              - mean * mean, 0.0)
            scale = gamma * jax.lax.rsqrt(var + EPS)
            return y * scale + (beta - mean * scale)

        # conv1: Conv2d(1,2,k=5,p=1) -> MaxPool2d(2,2) -> ReLU -> BatchNorm2d(2)
        y1 = conv_block(x_ref[...], c1_ref, rows[0:1], rows[1:2], rows[2:3],
                        count1)
        # conv2: Conv2d(2,4,k=3,p=1) -> MaxPool2d(2,2) -> ReLU -> BatchNorm2d(4)
        y2 = conv_block(y1, c2_ref, rows[3:4], rows[4:5], rows[5:6], count2)

        # y2 lanes 0..35 are already in PyTorch's (c,h,w) flatten order.
        h1 = relu_bn1d(dot(y2, fcw_ref[0]) + rows[6:7], rows[7:8], rows[8:9])
        h2 = relu_bn1d(dot(h1, fcw_ref[1]) + rows[9:10], rows[10:11], rows[11:12])
        o_ref[...] = dot(h2, fcw_ref[2]) + rows[12:13]   # lane-dense (N,128) store

    return kernel


def speech_recognition_net(x_nchw, ops, meta):
    """x_nchw: (N, 1, H, W) float32; ops/meta from prepare_operands()."""
    sp1, sp2, num_classes = meta
    n = x_nchw.shape[0]
    x2d = x_nchw.reshape(n, -1).astype(jnp.float32)       # (N, C*H*W), C_in = 1
    out = pl.pallas_call(
        _make_kernel(n, sp1, sp2),
        out_shape=jax.ShapeDtypeStruct((n, LANES), jnp.float32),
        in_specs=[_vmem() for _ in range(1 + len(ops))],
        out_specs=_vmem(),
    )(x2d, *ops)
    return out[:, :num_classes]


# ------------------ one-time host-side parameter preparation ---------------- #

def _conv_as_dense(w_oihw, h_in, w_in, pad):
    """Fold Conv2d weights (+ zero padding) into a dense matrix acting on the
    flattened per-image (c,h,w) input; output features ordered (oc, oh, ow)."""
    wnp = np.asarray(w_oihw, np.float32)
    oc_n, ic_n, kh, kw = wnp.shape
    oh = h_in + 2 * pad - kh + 1
    ow = w_in + 2 * pad - kw + 1
    a = np.zeros((ic_n * h_in * w_in, oc_n * oh * ow), np.float32)
    for oc in range(oc_n):
        for ic in range(ic_n):
            for r in range(oh):
                for c in range(ow):
                    col = oc * oh * ow + r * ow + c
                    for di in range(kh):
                        hi = r + di - pad
                        if hi < 0 or hi >= h_in:
                            continue
                        for dj in range(kw):
                            wi = c + dj - pad
                            if wi < 0 or wi >= w_in:
                                continue
                            a[ic * h_in * w_in + hi * w_in + wi, col] += \
                                wnp[oc, ic, di, dj]
    return a, oh, ow


def _pool_corner_selects(c_n, h_in, w_in):
    """Four 0/1 matrices; matmul with each gathers one corner of every 2x2,
    stride-2 max-pool window (floor mode).  Features stay (c, ph, pw)."""
    ph, pw = h_in // 2, w_in // 2
    mats = []
    for a in range(2):
        for b in range(2):
            s = np.zeros((c_n * h_in * w_in, c_n * ph * pw), np.float32)
            for c in range(c_n):
                for r in range(ph):
                    for q in range(pw):
                        s[c * h_in * w_in + (2 * r + a) * w_in + (2 * q + b),
                          c * ph * pw + r * pw + q] = 1.0
            mats.append(s)
    return mats, ph, pw


def _folded_conv_pool_operator(w, bias, h_in, w_in, pad, in_rows):
    """Dense conv folded with the four pool corner selections; each corner gets
    its own zero-padded 128-lane block -> operator (in_rows, 512) plus the
    corner-invariant pooled bias row (1, 128)."""
    a, oh, ow = _conv_as_dense(w, h_in, w_in, pad)
    c_n = np.asarray(w).shape[0]
    sels, ph, pw = _pool_corner_selects(c_n, oh, ow)
    npool = c_n * ph * pw
    assert npool <= LANES and a.shape[0] <= in_rows
    op = np.zeros((in_rows, 4 * LANES), np.float32)
    for k, s in enumerate(sels):
        op[:a.shape[0], k * LANES:k * LANES + npool] = a @ s
    bias_row = np.zeros((1, LANES), np.float32)
    bias_row[0, :npool] = np.repeat(np.asarray(bias, np.float32), ph * pw)
    return op, bias_row, c_n, ph, pw


def _combined_channel_indicator(c1n, sp1, c2n, sp2):
    """Single (128,128) indicator shared by both BN2d blocks: conv1 channels
    live in columns 0..c1n-1 (over conv1's lane layout), conv2 channels in
    columns c1n..c1n+c2n-1 (over conv2's lane layout).  Padded lanes are
    all-zero rows, so they never contaminate the statistics."""
    m = np.zeros((LANES, LANES), np.float32)
    for c in range(c1n):
        m[c * sp1:(c + 1) * sp1, c] = 1.0
    for c in range(c2n):
        m[c * sp2:(c + 1) * sp2, c1n + c] = 1.0
    return m


def _row(vals, offset=0):
    r = np.zeros((1, LANES), np.float32)
    v = np.asarray(vals, np.float32).ravel()
    r[0, offset:offset + v.size] = v
    return r


def _padded_fc(w_out_in):
    """PyTorch (out,in) Linear weight -> lane-dense (128,128) x@W operator."""
    w = np.asarray(w_out_in, np.float32).T      # (in, out)
    p = np.zeros((LANES, LANES), np.float32)
    p[:w.shape[0], :w.shape[1]] = w
    return p


def init_params(batch_shape):
    """Deterministic synthetic parameters matching the PyTorch __init__ shapes."""
    _, _, H, W = batch_shape
    h1, w1 = (H + 2 - 5 + 1) // 2, (W + 2 - 5 + 1) // 2     # conv1 k=5 p=1 -> pool2
    h2, w2 = (h1 + 2 - 3 + 1) // 2, (w1 + 2 - 3 + 1) // 2   # conv2 k=3 p=1 -> pool2
    num_flat = 4 * h2 * w2
    f1, f2, ncls = num_flat // 2, num_flat // 4, 2

    keys = jax.random.split(jax.random.PRNGKey(42), 10)
    rnd = lambda key, shape: (0.1 * jax.random.normal(key, shape)).astype(jnp.float32)
    p = {
        "w1": rnd(keys[0], (2, 1, 5, 5)),   "b1": rnd(keys[1], (2,)),
        "g1": jnp.ones((2,), jnp.float32),  "be1": jnp.zeros((2,), jnp.float32),
        "w2": rnd(keys[2], (4, 2, 3, 3)),   "b2": rnd(keys[3], (4,)),
        "g2": jnp.ones((4,), jnp.float32),  "be2": jnp.zeros((4,), jnp.float32),
        "fw1": rnd(keys[4], (f1, num_flat)), "fb1": rnd(keys[5], (f1,)),
        "fg1": jnp.ones((f1,), jnp.float32), "fbe1": jnp.zeros((f1,), jnp.float32),
        "fw2": rnd(keys[6], (f2, f1)),       "fb2": rnd(keys[7], (f2,)),
        "fg2": jnp.ones((f2,), jnp.float32), "fbe2": jnp.zeros((f2,), jnp.float32),
        "fw3": rnd(keys[8], (ncls, f2)),     "fb3": rnd(keys[9], (ncls,)),
    }
    return p, num_flat


def prepare_operands(p, batch_shape):
    """One-time prep: pool-folded conv operators (one per conv block), combined
    BN channel indicators, lane-dense padded FC weight stack, and one (16,128)
    slab holding every bias/gamma/beta row.  5 constant operands total."""
    _, cin, h, w = batch_shape

    c1op, b1row, c1n, ph1, pw1 = _folded_conv_pool_operator(
        p["w1"], p["b1"], h, w, pad=1, in_rows=cin * h * w)
    c2op, b2row, c2n, ph2, pw2 = _folded_conv_pool_operator(
        p["w2"], p["b2"], ph1, pw1, pad=1, in_rows=LANES)

    m = _combined_channel_indicator(c1n, ph1 * pw1, c2n, ph2 * pw2)
    bni = np.stack([m, np.ascontiguousarray(m.T)]).astype(np.float32)  # (2,128,128)

    fcw = np.stack([_padded_fc(p["fw1"]),
                    _padded_fc(p["fw2"]),
                    _padded_fc(p["fw3"])]).astype(np.float32)          # (3,128,128)

    rows = np.concatenate([
        b1row, _row(p["g1"]), _row(p["be1"]),
        b2row, _row(p["g2"], offset=c1n), _row(p["be2"], offset=c1n),
        _row(p["fb1"]), _row(p["fg1"]), _row(p["fbe1"]),
        _row(p["fb2"]), _row(p["fg2"]), _row(p["fbe2"]),
        _row(p["fb3"]),
        np.zeros((3, LANES), np.float32),
    ], axis=0)                                                         # (16,128)

    ops = (jnp.asarray(c1op), jnp.asarray(c2op), jnp.asarray(fcw),
           jnp.asarray(bni), jnp.asarray(rows))
    meta = (ph1 * pw1, ph2 * pw2, int(np.asarray(p["fw3"]).shape[0]))
    return ops, meta


# ----------------------------------- main ----------------------------------- #

if __name__ == "__main__":
    batch_shape = (2, 1, 16, 16)            # (N, C, H, W), as the PyTorch module expects
    params, num_flat = init_params(batch_shape)
    assert num_flat == 36

    ops, meta = prepare_operands(params, batch_shape)
    x = jax.random.normal(jax.random.PRNGKey(0), batch_shape, dtype=jnp.float32)

    fwd = jax.jit(speech_recognition_net, static_argnums=2)
    out = fwd(x, ops, meta)
    jax.block_until_ready(out)

    assert out.shape == (2, 2) and out.dtype == jnp.float32
    print("KERNEL_OK")
</pallas_src>

<mosaic_0001>
module attributes {stable_mosaic.version = 11 : i64} {
  func.func @kernel(%arg0: memref<2x256xf32, #tpu.memory_space<vmem>>, %arg1: memref<256x512xf32, #tpu.memory_space<vmem>>, %arg2: memref<128x512xf32, #tpu.memory_space<vmem>>, %arg3: memref<3x128x128xf32, #tpu.memory_space<vmem>>, %arg4: memref<2x128x128xf32, #tpu.memory_space<vmem>>, %arg5: memref<16x128xf32, #tpu.memory_space<vmem>>, %arg6: memref<2x128xf32, #tpu.memory_space<vmem>>) attributes {dimension_semantics = [], scalar_prefetch = 0 : i64, scratch_operands = 0 : i64, tpu.core_type = #tpu.core_type<tc>} {
    %c0 = arith.constant 0 : index
    %c0_0 = arith.constant 0 : index
    %0 = vector.load %arg5[%c0, %c0_0] : memref<16x128xf32, #tpu.memory_space<vmem>>, vector<16x128xf32>
    %c0_1 = arith.constant 0 : index
    %c0_2 = arith.constant 0 : index
    %c0_3 = arith.constant 0 : index
    %1 = vector.load %arg4[%c0_1, %c0_2, %c0_3] : memref<2x128x128xf32, #tpu.memory_space<vmem>>, vector<1x128x128xf32>
    %2 = vector.shape_cast %1 : vector<1x128x128xf32> to vector<128x128xf32>
    %c1 = arith.constant 1 : index
    %c0_4 = arith.constant 0 : index
    %c0_5 = arith.constant 0 : index
    %3 = vector.load %arg4[%c1, %c0_4, %c0_5] : memref<2x128x128xf32, #tpu.memory_space<vmem>>, vector<1x128x128xf32>
    %4 = vector.shape_cast %3 : vector<1x128x128xf32> to vector<128x128xf32>
    %c0_6 = arith.constant 0 : index
    %c0_7 = arith.constant 0 : index
    %5 = vector.load %arg0[%c0_6, %c0_7] : memref<2x256xf32, #tpu.memory_space<vmem>>, vector<2x256xf32>
    %6 = vector.extract_strided_slice %0 {offsets = [0, 0], sizes = [1, 128], strides = [1, 1]} : vector<16x128xf32> to vector<1x128xf32>
    %7 = vector.extract_strided_slice %0 {offsets = [1, 0], sizes = [1, 128], strides = [1, 1]} : vector<16x128xf32> to vector<1x128xf32>
    %8 = vector.extract_strided_slice %0 {offsets = [2, 0], sizes = [1, 128], strides = [1, 1]} : vector<16x128xf32> to vector<1x128xf32>
    %c0_8 = arith.constant 0 : index
    %c0_9 = arith.constant 0 : index
    %9 = vector.load %arg1[%c0_8, %c0_9] : memref<256x512xf32, #tpu.memory_space<vmem>>, vector<256x512xf32>
    %cst = arith.constant dense<0.000000e+00> : vector<2x512xf32>
    %10 = tpu.matmul %5, %9, %cst {dimension_numbers = #tpu.dot_dimension_numbers<[1], [0], [0], [1], [0, 0, 1, 1], [], []>} : vector<2x256xf32>, vector<256x512xf32>, vector<2x512xf32> -> vector<2x512xf32>
    %11 = vector.extract_strided_slice %10 {offsets = [0, 0], sizes = [2, 128], strides = [1, 1]} : vector<2x512xf32> to vector<2x128xf32>
    %12 = vector.extract_strided_slice %10 {offsets = [0, 128], sizes = [2, 128], strides = [1, 1]} : vector<2x512xf32> to vector<2x128xf32>
    %13 = arith.maximumf %11, %12 : vector<2x128xf32>
    %14 = vector.extract_strided_slice %10 {offsets = [0, 256], sizes = [2, 128], strides = [1, 1]} : vector<2x512xf32> to vector<2x128xf32>
    %15 = vector.extract_strided_slice %10 {offsets = [0, 384], sizes = [2, 128], strides = [1, 1]} : vector<2x512xf32> to vector<2x128xf32>
    %16 = arith.maximumf %14, %15 : vector<2x128xf32>
    %17 = arith.maximumf %13, %16 : vector<2x128xf32>
    %18 = vector.broadcast %6 : vector<1x128xf32> to vector<2x128xf32>
    %19 = arith.addf %17, %18 : vector<2x128xf32>
    %cst_10 = arith.constant 0.000000e+00 : f32
    %20 = vector.broadcast %cst_10 : f32 to vector<2x128xf32>
    %21 = arith.maximumf %19, %20 : vector<2x128xf32>
    %cst_11 = arith.constant dense<0.000000e+00> : vector<128xf32>
    %22 = vector.multi_reduction <add>, %21, %cst_11 [0] : vector<2x128xf32> to vector<128xf32>
    %23 = vector.shape_cast %22 : vector<128xf32> to vector<1x128xf32>
    %24 = arith.mulf %21, %21 : vector<2x128xf32>
    %cst_12 = arith.constant dense<0.000000e+00> : vector<128xf32>
    %25 = vector.multi_reduction <add>, %24, %cst_12 [0] : vector<2x128xf32> to vector<128xf32>
    %26 = vector.shape_cast %25 : vector<128xf32> to vector<1x128xf32>
    %27 = tpu.concatenate %23, %26 in 0 : vector<1x128xf32>, vector<1x128xf32> -> vector<2x128xf32>
    %cst_13 = arith.constant dense<0.000000e+00> : vector<2x128xf32>
    %28 = tpu.matmul %27, %2, %cst_13 {dimension_numbers = #tpu.dot_dimension_numbers<[1], [0], [0], [1], [0, 0, 1, 1], [], []>} : vector<2x128xf32>, vector<128x128xf32>, vector<2x128xf32> -> vector<2x128xf32>
    %29 = vector.extract_strided_slice %28 {offsets = [0, 0], sizes = [1, 128], strides = [1, 1]} : vector<2x128xf32> to vector<1x128xf32>
    %cst_14 = arith.constant 9.800000e+01 : f32
    %30 = vector.broadcast %cst_14 : f32 to vector<1x128xf32>
    %31 = arith.divf %29, %30 : vector<1x128xf32>
    %32 = vector.extract_strided_slice %28 {offsets = [1, 0], sizes = [1, 128], strides = [1, 1]} : vector<2x128xf32> to vector<1x128xf32>
    %cst_15 = arith.constant 9.800000e+01 : f32
    %33 = vector.broadcast %cst_15 : f32 to vector<1x128xf32>
    %34 = arith.divf %32, %33 : vector<1x128xf32>
    %35 = arith.mulf %31, %31 : vector<1x128xf32>
    %36 = arith.subf %34, %35 : vector<1x128xf32>
    %cst_16 = arith.constant 0.000000e+00 : f32
    %37 = vector.broadcast %cst_16 : f32 to vector<1x128xf32>
    %38 = arith.maximumf %36, %37 : vector<1x128xf32>
    %cst_17 = arith.constant 9.99999974E-6 : f32
    %39 = vector.broadcast %cst_17 : f32 to vector<1x128xf32>
    %40 = arith.addf %38, %39 : vector<1x128xf32>
    %41 = math.rsqrt %40 : vector<1x128xf32>
    %42 = arith.mulf %7, %41 : vector<1x128xf32>
    %43 = arith.mulf %31, %42 : vector<1x128xf32>
    %44 = arith.subf %8, %43 : vector<1x128xf32>
    %45 = tpu.concatenate %42, %44 in 0 : vector<1x128xf32>, vector<1x128xf32> -> vector<2x128xf32>
    %cst_18 = arith.constant dense<0.000000e+00> : vector<2x128xf32>
    %46 = tpu.matmul %45, %4, %cst_18 {dimension_numbers = #tpu.dot_dimension_numbers<[1], [0], [0], [1], [0, 0, 1, 1], [], []>} : vector<2x128xf32>, vector<128x128xf32>, vector<2x128xf32> -> vector<2x128xf32>
    %47 = vector.extract_strided_slice %46 {offsets = [0, 0], sizes = [1, 128], strides = [1, 1]} : vector<2x128xf32> to vector<1x128xf32>
    %48 = vector.broadcast %47 : vector<1x128xf32> to vector<2x128xf32>
    %49 = arith.mulf %21, %48 : vector<2x128xf32>
    %50 = vector.extract_strided_slice %46 {offsets = [1, 0], sizes = [1, 128], strides = [1, 1]} : vector<2x128xf32> to vector<1x128xf32>
    %51 = vector.broadcast %50 : vector<1x128xf32> to vector<2x128xf32>
    %52 = arith.addf %49, %51 : vector<2x128xf32>
    %53 = vector.extract_strided_slice %0 {offsets = [3, 0], sizes = [1, 128], strides = [1, 1]} : vector<16x128xf32> to vector<1x128xf32>
    %54 = vector.extract_strided_slice %0 {offsets = [4, 0], sizes = [1, 128], strides = [1, 1]} : vector<16x128xf32> to vector<1x128xf32>
    %55 = vector.extract_strided_slice %0 {offsets = [5, 0], sizes = [1, 128], strides = [1, 1]} : vector<16x128xf32> to vector<1x128xf32>
    %c0_19 = arith.constant 0 : index
    %c0_20 = arith.constant 0 : index
    %56 = vector.load %arg2[%c0_19, %c0_20] : memref<128x512xf32, #tpu.memory_space<vmem>>, vector<128x512xf32>
    %cst_21 = arith.constant dense<0.000000e+00> : vector<2x512xf32>
    %57 = tpu.matmul %52, %56, %cst_21 {dimension_numbers = #tpu.dot_dimension_numbers<[1], [0], [0], [1], [0, 0, 1, 1], [], []>} : vector<2x128xf32>, vector<128x512xf32>, vector<2x512xf32> -> vector<2x512xf32>
    %58 = vector.extract_strided_slice %57 {offsets = [0, 0], sizes = [2, 128], strides = [1, 1]} : vector<2x512xf32> to vector<2x128xf32>
    %59 = vector.extract_strided_slice %57 {offsets = [0, 128], sizes = [2, 128], strides = [1, 1]} : vector<2x512xf32> to vector<2x128xf32>
    %60 = arith.maximumf %58, %59 : vector<2x128xf32>
    %61 = vector.extract_strided_slice %57 {offsets = [0, 256], sizes = [2, 128], strides = [1, 1]} : vector<2x512xf32> to vector<2x128xf32>
    %62 = vector.extract_strided_slice %57 {offsets = [0, 384], sizes = [2, 128], strides = [1, 1]} : vector<2x512xf32> to vector<2x128xf32>
    %63 = arith.maximumf %61, %62 : vector<2x128xf32>
    %64 = arith.maximumf %60, %63 : vector<2x128xf32>
    %65 = vector.broadcast %53 : vector<1x128xf32> to vector<2x128xf32>
    %66 = arith.addf %64, %65 : vector<2x128xf32>
    %cst_22 = arith.constant 0.000000e+00 : f32
    %67 = vector.broadcast %cst_22 : f32 to vector<2x128xf32>
    %68 = arith.maximumf %66, %67 : vector<2x128xf32>
    %cst_23 = arith.constant dense<0.000000e+00> : vector<128xf32>
    %69 = vector.multi_reduction <add>, %68, %cst_23 [0] : vector<2x128xf32> to vector<128xf32>
    %70 = vector.shape_cast %69 : vector<128xf32> to vector<1x128xf32>
    %71 = arith.mulf %68, %68 : vector<2x128xf32>
    %cst_24 = arith.constant dense<0.000000e+00> : vector<128xf32>
    %72 = vector.multi_reduction <add>, %71, %cst_24 [0] : vector<2x128xf32> to vector<128xf32>
    %73 = vector.shape_cast %72 : vector<128xf32> to vector<1x128xf32>
    %74 = tpu.concatenate %70, %73 in 0 : vector<1x128xf32>, vector<1x128xf32> -> vector<2x128xf32>
    %cst_25 = arith.constant dense<0.000000e+00> : vector<2x128xf32>
    %75 = tpu.matmul %74, %2, %cst_25 {dimension_numbers = #tpu.dot_dimension_numbers<[1], [0], [0], [1], [0, 0, 1, 1], [], []>} : vector<2x128xf32>, vector<128x128xf32>, vector<2x128xf32> -> vector<2x128xf32>
    %76 = vector.extract_strided_slice %75 {offsets = [0, 0], sizes = [1, 128], strides = [1, 1]} : vector<2x128xf32> to vector<1x128xf32>
    %cst_26 = arith.constant 1.800000e+01 : f32
    %77 = vector.broadcast %cst_26 : f32 to vector<1x128xf32>
    %78 = arith.divf %76, %77 : vector<1x128xf32>
    %79 = vector.extract_strided_slice %75 {offsets = [1, 0], sizes = [1, 128], strides = [1, 1]} : vector<2x128xf32> to vector<1x128xf32>
    %cst_27 = arith.constant 1.800000e+01 : f32
    %80 = vector.broadcast %cst_27 : f32 to vector<1x128xf32>
    %81 = arith.divf %79, %80 : vector<1x128xf32>
    %82 = arith.mulf %78, %78 : vector<1x128xf32>
    %83 = arith.subf %81, %82 : vector<1x128xf32>
    %cst_28 = arith.constant 0.000000e+00 : f32
    %84 = vector.broadcast %cst_28 : f32 to vector<1x128xf32>
    %85 = arith.maximumf %83, %84 : vector<1x128xf32>
    %cst_29 = arith.constant 9.99999974E-6 : f32
    %86 = vector.broadcast %cst_29 : f32 to vector<1x128xf32>
    %87 = arith.addf %85, %86 : vector<1x128xf32>
    %88 = math.rsqrt %87 : vector<1x128xf32>
    %89 = arith.mulf %54, %88 : vector<1x128xf32>
    %90 = arith.mulf %78, %89 : vector<1x128xf32>
    %91 = arith.subf %55, %90 : vector<1x128xf32>
    %92 = tpu.concatenate %89, %91 in 0 : vector<1x128xf32>, vector<1x128xf32> -> vector<2x128xf32>
    %cst_30 = arith.constant dense<0.000000e+00> : vector<2x128xf32>
    %93 = tpu.matmul %92, %4, %cst_30 {dimension_numbers = #tpu.dot_dimension_numbers<[1], [0], [0], [1], [0, 0, 1, 1], [], []>} : vector<2x128xf32>, vector<128x128xf32>, vector<2x128xf32> -> vector<2x128xf32>
    %94 = vector.extract_strided_slice %93 {offsets = [0, 0], sizes = [1, 128], strides = [1, 1]} : vector<2x128xf32> to vector<1x128xf32>
    %95 = vector.broadcast %94 : vector<1x128xf32> to vector<2x128xf32>
    %96 = arith.mulf %68, %95 : vector<2x128xf32>
    %97 = vector.extract_strided_slice %93 {offsets = [1, 0], sizes = [1, 128], strides = [1, 1]} : vector<2x128xf32> to vector<1x128xf32>
    %98 = vector.broadcast %97 : vector<1x128xf32> to vector<2x128xf32>
    %99 = arith.addf %96, %98 : vector<2x128xf32>
    %c0_31 = arith.constant 0 : index
    %c0_32 = arith.constant 0 : index
    %c0_33 = arith.constant 0 : index
    %100 = vector.load %arg3[%c0_31, %c0_32, %c0_33] : memref<3x128x128xf32, #tpu.memory_space<vmem>>, vector<1x128x128xf32>
    %101 = vector.shape_cast %100 : vector<1x128x128xf32> to vector<128x128xf32>
    %cst_34 = arith.constant dense<0.000000e+00> : vector<2x128xf32>
    %102 = tpu.matmul %99, %101, %cst_34 {dimension_numbers = #tpu.dot_dimension_numbers<[1], [0], [0], [1], [0, 0, 1, 1], [], []>} : vector<2x128xf32>, vector<128x128xf32>, vector<2x128xf32> -> vector<2x128xf32>
    %103 = vector.extract_strided_slice %0 {offsets = [6, 0], sizes = [1, 128], strides = [1, 1]} : vector<16x128xf32> to vector<1x128xf32>
    %104 = vector.broadcast %103 : vector<1x128xf32> to vector<2x128xf32>
    %105 = arith.addf %102, %104 : vector<2x128xf32>
    %106 = vector.extract_strided_slice %0 {offsets = [7, 0], sizes = [1, 128], strides = [1, 1]} : vector<16x128xf32> to vector<1x128xf32>
    %107 = vector.extract_strided_slice %0 {offsets = [8, 0], sizes = [1, 128], strides = [1, 1]} : vector<16x128xf32> to vector<1x128xf32>
    %cst_35 = arith.constant 0.000000e+00 : f32
    %108 = vector.broadcast %cst_35 : f32 to vector<2x128xf32>
    %109 = arith.maximumf %105, %108 : vector<2x128xf32>
    %cst_36 = arith.constant dense<0.000000e+00> : vector<128xf32>
    %110 = vector.multi_reduction <add>, %109, %cst_36 [0] : vector<2x128xf32> to vector<128xf32>
    %111 = vector.shape_cast %110 : vector<128xf32> to vector<1x128xf32>
    %cst_37 = arith.constant 2.000000e+00 : f32
    %112 = vector.broadcast %cst_37 : f32 to vector<1x128xf32>
    %113 = arith.divf %111, %112 : vector<1x128xf32>
    %114 = arith.mulf %109, %109 : vector<2x128xf32>
    %cst_38 = arith.constant dense<0.000000e+00> : vector<128xf32>
    %115 = vector.multi_reduction <add>, %114, %cst_38 [0] : vector<2x128xf32> to vector<128xf32>
    %116 = vector.shape_cast %115 : vector<128xf32> to vector<1x128xf32>
    %cst_39 = arith.constant 2.000000e+00 : f32
    %117 = vector.broadcast %cst_39 : f32 to vector<1x128xf32>
    %118 = arith.divf %116, %117 : vector<1x128xf32>
    %119 = arith.mulf %113, %113 : vector<1x128xf32>
    %120 = arith.subf %118, %119 : vector<1x128xf32>
    %cst_40 = arith.constant 0.000000e+00 : f32
    %121 = vector.broadcast %cst_40 : f32 to vector<1x128xf32>
    %122 = arith.maximumf %120, %121 : vector<1x128xf32>
    %cst_41 = arith.constant 9.99999974E-6 : f32
    %123 = vector.broadcast %cst_41 : f32 to vector<1x128xf32>
    %124 = arith.addf %122, %123 : vector<1x128xf32>
    %125 = math.rsqrt %124 : vector<1x128xf32>
    %126 = arith.mulf %106, %125 : vector<1x128xf32>
    %127 = vector.broadcast %126 : vector<1x128xf32> to vector<2x128xf32>
    %128 = arith.mulf %109, %127 : vector<2x128xf32>
    %129 = arith.mulf %113, %126 : vector<1x128xf32>
    %130 = arith.subf %107, %129 : vector<1x128xf32>
    %131 = vector.broadcast %130 : vector<1x128xf32> to vector<2x128xf32>
    %132 = arith.addf %128, %131 : vector<2x128xf32>
    %c1_42 = arith.constant 1 : index
    %c0_43 = arith.constant 0 : index
    %c0_44 = arith.constant 0 : index
    %133 = vector.load %arg3[%c1_42, %c0_43, %c0_44] : memref<3x128x128xf32, #tpu.memory_space<vmem>>, vector<1x128x128xf32>
    %134 = vector.shape_cast %133 : vector<1x128x128xf32> to vector<128x128xf32>
    %cst_45 = arith.constant dense<0.000000e+00> : vector<2x128xf32>
    %135 = tpu.matmul %132, %134, %cst_45 {dimension_numbers = #tpu.dot_dimension_numbers<[1], [0], [0], [1], [0, 0, 1, 1], [], []>} : vector<2x128xf32>, vector<128x128xf32>, vector<2x128xf32> -> vector<2x128xf32>
    %136 = vector.extract_strided_slice %0 {offsets = [9, 0], sizes = [1, 128], strides = [1, 1]} : vector<16x128xf32> to vector<1x128xf32>
    %137 = vector.broadcast %136 : vector<1x128xf32> to vector<2x128xf32>
    %138 = arith.addf %135, %137 : vector<2x128xf32>
    %139 = vector.extract_strided_slice %0 {offsets = [10, 0], sizes = [1, 128], strides = [1, 1]} : vector<16x128xf32> to vector<1x128xf32>
    %140 = vector.extract_strided_slice %0 {offsets = [11, 0], sizes = [1, 128], strides = [1, 1]} : vector<16x128xf32> to vector<1x128xf32>
    %cst_46 = arith.constant 0.000000e+00 : f32
    %141 = vector.broadcast %cst_46 : f32 to vector<2x128xf32>
    %142 = arith.maximumf %138, %141 : vector<2x128xf32>
    %cst_47 = arith.constant dense<0.000000e+00> : vector<128xf32>
    %143 = vector.multi_reduction <add>, %142, %cst_47 [0] : vector<2x128xf32> to vector<128xf32>
    %144 = vector.shape_cast %143 : vector<128xf32> to vector<1x128xf32>
    %cst_48 = arith.constant 2.000000e+00 : f32
    %145 = vector.broadcast %cst_48 : f32 to vector<1x128xf32>
    %146 = arith.divf %144, %145 : vector<1x128xf32>
    %147 = arith.mulf %142, %142 : vector<2x128xf32>
    %cst_49 = arith.constant dense<0.000000e+00> : vector<128xf32>
    %148 = vector.multi_reduction <add>, %147, %cst_49 [0] : vector<2x128xf32> to vector<128xf32>
    %149 = vector.shape_cast %148 : vector<128xf32> to vector<1x128xf32>
    %cst_50 = arith.constant 2.000000e+00 : f32
    %150 = vector.broadcast %cst_50 : f32 to vector<1x128xf32>
    %151 = arith.divf %149, %150 : vector<1x128xf32>
    %152 = arith.mulf %146, %146 : vector<1x128xf32>
    %153 = arith.subf %151, %152 : vector<1x128xf32>
    %cst_51 = arith.constant 0.000000e+00 : f32
    %154 = vector.broadcast %cst_51 : f32 to vector<1x128xf32>
    %155 = arith.maximumf %153, %154 : vector<1x128xf32>
    %cst_52 = arith.constant 9.99999974E-6 : f32
    %156 = vector.broadcast %cst_52 : f32 to vector<1x128xf32>
    %157 = arith.addf %155, %156 : vector<1x128xf32>
    %158 = math.rsqrt %157 : vector<1x128xf32>
    %159 = arith.mulf %139, %158 : vector<1x128xf32>
    %160 = vector.broadcast %159 : vector<1x128xf32> to vector<2x128xf32>
    %161 = arith.mulf %142, %160 : vector<2x128xf32>
    %162 = arith.mulf %146, %159 : vector<1x128xf32>
    %163 = arith.subf %140, %162 : vector<1x128xf32>
    %164 = vector.broadcast %163 : vector<1x128xf32> to vector<2x128xf32>
    %165 = arith.addf %161, %164 : vector<2x128xf32>
    %c2 = arith.constant 2 : index
    %c0_53 = arith.constant 0 : index
    %c0_54 = arith.constant 0 : index
    %166 = vector.load %arg3[%c2, %c0_53, %c0_54] : memref<3x128x128xf32, #tpu.memory_space<vmem>>, vector<1x128x128xf32>
    %167 = vector.shape_cast %166 : vector<1x128x128xf32> to vector<128x128xf32>
    %cst_55 = arith.constant dense<0.000000e+00> : vector<2x128xf32>
    %168 = tpu.matmul %165, %167, %cst_55 {dimension_numbers = #tpu.dot_dimension_numbers<[1], [0], [0], [1], [0, 0, 1, 1], [], []>} : vector<2x128xf32>, vector<128x128xf32>, vector<2x128xf32> -> vector<2x128xf32>
    %169 = vector.extract_strided_slice %0 {offsets = [12, 0], sizes = [1, 128], strides = [1, 1]} : vector<16x128xf32> to vector<1x128xf32>
    %170 = vector.broadcast %169 : vector<1x128xf32> to vector<2x128xf32>
    %171 = arith.addf %168, %170 : vector<2x128xf32>
    %c0_56 = arith.constant 0 : index
    %c0_57 = arith.constant 0 : index
    %172 = vector.load %arg6[%c0_56, %c0_57] : memref<2x128xf32, #tpu.memory_space<vmem>>, vector<2x128xf32>
    tpu.vector_store %arg6[%c0_56, %c0_57], %171 {strides = array<i32>} : memref<2x128xf32, #tpu.memory_space<vmem>>, vector<2x128xf32>,
    return
  }
}

</mosaic_0001>

<llo_original>
// kernel: speech_recognition_net.1
$region0: #{speech_recognition_net.1}
  #allocation0 [shape = 'u32[]', space=smem, size = 0x4, offset = 0x4, fixed_abs, tag = 'smem constant byte address 0x4 - core index']
  #allocation1 [shape = 'u32[144,128]{1,0:T(1,128)}', space=vmem, size = 0x12000, scoped, tag = 'internal scratch']
  %s0 = inlined_call_operand.vmem [shape: f32[2,256], index: 0, kind: input, shape index: {}]
  %s1 = inlined_call_operand.hbm [shape: f32[256,512], index: 1, kind: input, shape index: {}]
  %s2 = inlined_call_operand.hbm [shape: f32[128,512], index: 2, kind: input, shape index: {}]
  %s3 = inlined_call_operand.hbm [shape: f32[3,128,128], index: 3, kind: input, shape index: {}]
  %s4 = inlined_call_operand.hbm [shape: f32[2,128,128], index: 4, kind: input, shape index: {}]
  %s5 = inlined_call_operand.vmem [shape: f32[16,128], index: 5, kind: input, shape index: {}]
  %s6 = inlined_call_operand.hbm [shape: f32[2,128], index: 6, kind: output, shape index: {}]
  %s7 = sld [smem:[#allocation0]]
  $region50: #{speech_recognition_net.1} parent=0
    _
  %s9 = ssub.s32 1, %s7
  %s10 = scalar_select 0, %s9, %s7
  $region1: #{speech_recognition_net.1} parent=0
    #allocation2 [shape = 'u8[524288]{0}', space=vmem, size = 0x80000, scoped, tag = 'input window, operand 1, single buffered']
    #allocation3 [shape = 's32[1]{0}', space=sflag, size = 0x4, scoped, tag = 'scoped memory for speech_recognition_net.1']
    #allocation4 [shape = 's32[1]{0}', space=sflag, size = 0x4, scoped, tag = 'scoped memory for speech_recognition_net.1']
    #allocation5 [shape = 'u8[262144]{0}', space=vmem, size = 0x40000, scoped, tag = 'input window, operand 2, single buffered']
    #allocation6 [shape = 's32[1]{0}', space=sflag, size = 0x4, scoped, tag = 'scoped memory for speech_recognition_net.1']
    #allocation7 [shape = 'u8[196608]{0}', space=vmem, size = 0x30000, scoped, tag = 'input window, operand 3, single buffered']
    #allocation8 [shape = 'u8[131072]{0}', space=vmem, size = 0x20000, scoped, tag = 'input window, operand 4, single buffered']
    #allocation9 [shape = 's32[1]{0}', space=sflag, size = 0x4, scoped, tag = 'scoped memory for speech_recognition_net.1']
    #allocation10 [shape = 'u8[1024]{0}', space=vmem, size = 0x400, scoped, tag = 'output window, operand 0, single buffered']
    %11 = vsyncpa [#allocation3], 0
    %12 = vsyncpa [#allocation6], 0
    %13 = vsyncpa [#allocation9], 0
    %14 = vsyncpa [#allocation4], 0
    // Predicated region
    $region2: #{speech_recognition_net.1} parent=1 // pred_check
      _
    $region3: #{speech_recognition_net.1} parent=1 // pred_check_branch
      %16 = sbr.rel (0) target = $region5
    $region4: #{speech_recognition_net.1} parent=1 // pred_region
      _
    $region5: #{speech_recognition_net.1} parent=1 // pred_fallthru
      _
    // Predicated region
    $region6: #{speech_recognition_net.1} parent=1 // pred_check
      _
    $region7: #{speech_recognition_net.1} parent=1 // pred_check_branch
      %18 = sbr.rel (0) target = $region9
    $region8: #{speech_recognition_net.1} parent=1 // pred_region
      %s20 = ssub.s32 16384, 16384
      %21 = vsyncadd [#allocation3], %s20
      %s22 = sshll.u32 [#allocation2], 4
      %s23 = int_to_ptr.vmem [resolvable:$true] %s22
      %28 = dma.hbm_to_vmem [thread:$0]  %s1, 16384, %s23, [#allocation3], 512, 512, 32
    $region9: #{speech_recognition_net.1} parent=1 // pred_fallthru
      _
    // Predicated region
    $region10: #{speech_recognition_net.1} parent=1 // pred_check
      _
    $region11: #{speech_recognition_net.1} parent=1 // pred_check_branch
      %30 = sbr.rel (0) target = $region13
    $region12: #{speech_recognition_net.1} parent=1 // pred_region
      %s32 = ssub.s32 8192, 8192
      %33 = vsyncadd [#allocation6], %s32
      %s34 = sshll.u32 [#allocation5], 4
      %s35 = int_to_ptr.vmem [resolvable:$true] %s34
      %40 = dma.hbm_to_vmem [thread:$0]  %s2, 8192, %s35, [#allocation6], 512, 512, 32
    $region13: #{speech_recognition_net.1} parent=1 // pred_fallthru
      _
    // Predicated region
    $region14: #{speech_recognition_net.1} parent=1 // pred_check
      _
    $region15: #{speech_recognition_net.1} parent=1 // pred_check_branch
      %42 = sbr.rel (0) target = $region17
    $region16: #{speech_recognition_net.1} parent=1 // pred_region
      %s44 = ssub.s32 6144, 6144
      %45 = vsyncadd [#allocation6], %s44
      %s46 = sshll.u32 [#allocation7], 4
      %s47 = int_to_ptr.vmem [resolvable:$true] %s46
      %52 = dma.hbm_to_vmem [thread:$0]  %s3, 6144, %s47, [#allocation6], 128, 128, 8
    $region17: #{speech_recognition_net.1} parent=1 // pred_fallthru
      _
    // Predicated region
    $region18: #{speech_recognition_net.1} parent=1 // pred_check
      _
    $region19: #{speech_recognition_net.1} parent=1 // pred_check_branch
      %54 = sbr.rel (0) target = $region21
    $region20: #{speech_recognition_net.1} parent=1 // pred_region
      %s56 = ssub.s32 4096, 4096
      %57 = vsyncadd [#allocation9], %s56
      %s58 = sshll.u32 [#allocation8], 4
      %s59 = int_to_ptr.vmem [resolvable:$true] %s58
      %64 = dma.hbm_to_vmem [thread:$0]  %s4, 4096, %s59, [#allocation9], 128, 128, 8
    $region21: #{speech_recognition_net.1} parent=1 // pred_fallthru
      _
    // Predicated region
    $region22: #{speech_recognition_net.1} parent=1 // pred_check
      _
    $region23: #{speech_recognition_net.1} parent=1 // pred_check_branch
      %66 = sbr.rel (0) target = $region25
    $region24: #{speech_recognition_net.1} parent=1 // pred_region
      _
    $region25: #{speech_recognition_net.1} parent=1 // pred_fallthru
      _
    // Predicated region
    $region26: #{speech_recognition_net.1} parent=1 // pred_check
      _
    $region27: #{speech_recognition_net.1} parent=1 // pred_check_branch
      %68 = sbr.rel (0) target = $region29
    $region28: #{speech_recognition_net.1} parent=1 // pred_region
      %69 = dma.done [#allocation3], 16384
    $region29: #{speech_recognition_net.1} parent=1 // pred_fallthru
      _
    // Predicated region
    $region30: #{speech_recognition_net.1} parent=1 // pred_check
      _
    $region31: #{speech_recognition_net.1} parent=1 // pred_check_branch
      %71 = sbr.rel (0) target = $region33
    $region32: #{speech_recognition_net.1} parent=1 // pred_region
      %72 = dma.done [#allocation6], 8192
    $region33: #{speech_recognition_net.1} parent=1 // pred_fallthru
      _
    // Predicated region
    $region34: #{speech_recognition_net.1} parent=1 // pred_check
      _
    $region35: #{speech_recognition_net.1} parent=1 // pred_check_branch
      %74 = sbr.rel (0) target = $region37
    $region36: #{speech_recognition_net.1} parent=1 // pred_region
      %75 = dma.done [#allocation6], 6144
    $region37: #{speech_recognition_net.1} parent=1 // pred_fallthru
      _
    // Predicated region
    $region38: #{speech_recognition_net.1} parent=1 // pred_check
      _
    $region39: #{speech_recognition_net.1} parent=1 // pred_check_branch
      %77 = sbr.rel (0) target = $region41
    $region40: #{speech_recognition_net.1} parent=1 // pred_region
      %78 = dma.done [#allocation9], 4096
    $region41: #{speech_recognition_net.1} parent=1 // pred_fallthru
      _
    %v79 = vld [vmem:[%s5] sm:$0xff]
    %v80 = vld [vmem:[%s5 + $0x8] sm:$0xff]
    %v81 = vld [vmem:[#allocation8] sm:$0xff]
    %v82 = vld [vmem:[#allocation8 + $0x8] sm:$0xff]
    %v83 = vld [vmem:[#allocation8 + $0x10] sm:$0xff]
    %v84 = vld [vmem:[#allocation8 + $0x18] sm:$0xff]
    %v85 = vld [vmem:[#allocation8 + $0x20] sm:$0xff]
    %v86 = vld [vmem:[#allocation8 + $0x28] sm:$0xff]
    %v87 = vld [vmem:[#allocation8 + $0x30] sm:$0xff]
    %v88 = vld [vmem:[#allocation8 + $0x38] sm:$0xff]
    %v89 = vld [vmem:[#allocation8 + $0x40] sm:$0xff]
    %v90 = vld [vmem:[#allocation8 + $0x48] sm:$0xff]
    %v91 = vld [vmem:[#allocation8 + $0x50] sm:$0xff]
    %v92 = vld [vmem:[#allocation8 + $0x58] sm:$0xff]
    %v93 = vld [vmem:[#allocation8 + $0x60] sm:$0xff]
    %v94 = vld [vmem:[#allocation8 + $0x68] sm:$0xff]
    %v95 = vld [vmem:[#allocation8 + $0x70] sm:$0xff]
    %v96 = vld [vmem:[#allocation8 + $0x78] sm:$0xff]
    %s97 = scalar_lea.vmem [#allocation8], 128
    %v98 = vld [vmem:[%s97] sm:$0xff]
    %v99 = vld [vmem:[%s97 + $0x8] sm:$0xff]
    %v100 = vld [vmem:[%s97 + $0x10] sm:$0xff]
    %v101 = vld [vmem:[%s97 + $0x18] sm:$0xff]
    %v102 = vld [vmem:[%s97 + $0x20] sm:$0xff]
    %v103 = vld [vmem:[%s97 + $0x28] sm:$0xff]
    %v104 = vld [vmem:[%s97 + $0x30] sm:$0xff]
    %v105 = vld [vmem:[%s97 + $0x38] sm:$0xff]
    %v106 = vld [vmem:[%s97 + $0x40] sm:$0xff]
    %v107 = vld [vmem:[%s97 + $0x48] sm:$0xff]
    %v108 = vld [vmem:[%s97 + $0x50] sm:$0xff]
    %v109 = vld [vmem:[%s97 + $0x58] sm:$0xff]
    %v110 = vld [vmem:[%s97 + $0x60] sm:$0xff]
    %v111 = vld [vmem:[%s97 + $0x68] sm:$0xff]
    %v112 = vld [vmem:[%s97 + $0x70] sm:$0xff]
    %v113 = vld [vmem:[%s97 + $0x78] sm:$0xff]
    %v114 = vld [vmem:[%s0] sm:$0xf]
    %v115 = vld [vmem:[#allocation2] sm:$0xff]
    %v116 = vld [vmem:[#allocation2 + $0x8] sm:$0xff]
    %v117 = vld [vmem:[#allocation2 + $0x10] sm:$0xff]
    %v118 = vld [vmem:[#allocation2 + $0x18] sm:$0xff]
    %v119 = vld [vmem:[#allocation2 + $0x20] sm:$0xff]
    %v120 = vld [vmem:[#allocation2 + $0x28] sm:$0xff]
    %v121 = vld [vmem:[#allocation2 + $0x30] sm:$0xff]
    %v122 = vld [vmem:[#allocation2 + $0x38] sm:$0xff]
    %v123 = vld [vmem:[#allocation2 + $0x40] sm:$0xff]
    %v124 = vld [vmem:[#allocation2 + $0x48] sm:$0xff]
    %v125 = vld [vmem:[#allocation2 + $0x50] sm:$0xff]
    %v126 = vld [vmem:[#allocation2 + $0x58] sm:$0xff]
    %v127 = vld [vmem:[#allocation2 + $0x60] sm:$0xff]
    %v128 = vld [vmem:[#allocation2 + $0x68] sm:$0xff]
    %v129 = vld [vmem:[#allocation2 + $0x70] sm:$0xff]
    %v130 = vld [vmem:[#allocation2 + $0x78] sm:$0xff]
    %v131 = vld [vmem:[#allocation2 + $0x80] sm:$0xff]
    %v132 = vld [vmem:[#allocation2 + $0x88] sm:$0xff]
    %v133 = vld [vmem:[#allocation2 + $0x90] sm:$0xff]
    %v134 = vld [vmem:[#allocation2 + $0x98] sm:$0xff]
    %v135 = vld [vmem:[#allocation2 + $0xa0] sm:$0xff]
    %v136 = vld [vmem:[#allocation2 + $0xa8] sm:$0xff]
    %v137 = vld [vmem:[#allocation2 + $0xb0] sm:$0xff]
    %v138 = vld [vmem:[#allocation2 + $0xb8] sm:$0xff]
    %v139 = vld [vmem:[#allocation2 + $0xc0] sm:$0xff]
    %v140 = vld [vmem:[#allocation2 + $0xc8] sm:$0xff]
    %v141 = vld [vmem:[#allocation2 + $0xd0] sm:$0xff]
    %v142 = vld [vmem:[#allocation2 + $0xd8] sm:$0xff]
    %v143 = vld [vmem:[#allocation2 + $0xe0] sm:$0xff]
    %v144 = vld [vmem:[#allocation2 + $0xe8] sm:$0xff]
    %v145 = vld [vmem:[#allocation2 + $0xf0] sm:$0xff]
    %v146 = vld [vmem:[#allocation2 + $0xf8] sm:$0xff]
    %v147 = vld [vmem:[#allocation2 + $0x100] sm:$0xff]
    %v148 = vld [vmem:[#allocation2 + $0x108] sm:$0xff]
    %v149 = vld [vmem:[#allocation2 + $0x110] sm:$0xff]
    %v150 = vld [vmem:[#allocation2 + $0x118] sm:$0xff]
    %v151 = vld [vmem:[#allocation2 + $0x120] sm:$0xff]
    %v152 = vld [vmem:[#allocation2 + $0x128] sm:$0xff]
    %v153 = vld [vmem:[#allocation2 + $0x130] sm:$0xff]
    %v154 = vld [vmem:[#allocation2 + $0x138] sm:$0xff]
    %v155 = vld [vmem:[#allocation2 + $0x140] sm:$0xff]
    %v156 = vld [vmem:[#allocation2 + $0x148] sm:$0xff]
    %v157 = vld [vmem:[#allocation2 + $0x150] sm:$0xff]
    %v158 = vld [vmem:[#allocation2 + $0x158] sm:$0xff]
    %v159 = vld [vmem:[#allocation2 + $0x160] sm:$0xff]
    %v160 = vld [vmem:[#allocation2 + $0x168] sm:$0xff]
    %v161 = vld [vmem:[#allocation2 + $0x170] sm:$0xff]
    %v162 = vld [vmem:[#allocation2 + $0x178] sm:$0xff]
    %v163 = vld [vmem:[#allocation2 + $0x180] sm:$0xff]
    %v164 = vld [vmem:[#allocation2 + $0x188] sm:$0xff]
    %v165 = vld [vmem:[#allocation2 + $0x190] sm:$0xff]
    %v166 = vld [vmem:[#allocation2 + $0x198] sm:$0xff]
    %v167 = vld [vmem:[#allocation2 + $0x1a0] sm:$0xff]
    %v168 = vld [vmem:[#allocation2 + $0x1a8] sm:$0xff]
    %v169 = vld [vmem:[#allocation2 + $0x1b0] sm:$0xff]
    %v170 = vld [vmem:[#allocation2 + $0x1b8] sm:$0xff]
    %v171 = vld [vmem:[#allocation2 + $0x1c0] sm:$0xff]
    %v172 = vld [vmem:[#allocation2 + $0x1c8] sm:$0xff]
    %v173 = vld [vmem:[#allocation2 + $0x1d0] sm:$0xff]
    %v174 = vld [vmem:[#allocation2 + $0x1d8] sm:$0xff]
    %v175 = vld [vmem:[#allocation2 + $0x1e0] sm:$0xff]
    %v176 = vld [vmem:[#allocation2 + $0x1e8] sm:$0xff]
    %v177 = vld [vmem:[#allocation2 + $0x1f0] sm:$0xff]
    %v178 = vld [vmem:[#allocation2 + $0x1f8] sm:$0xff]
    %v179 = vld [vmem:[#allocation2 + $0x200] sm:$0xff]
    %v180 = vld [vmem:[#allocation2 + $0x208] sm:$0xff]
    %v181 = vld [vmem:[#allocation2 + $0x210] sm:$0xff]
    %v182 = vld [vmem:[#allocation2 + $0x218] sm:$0xff]
    %v183 = vld [vmem:[#allocation2 + $0x220] sm:$0xff]
    %v184 = vld [vmem:[#allocation2 + $0x228] sm:$0xff]
    %v185 = vld [vmem:[#allocation2 + $0x230] sm:$0xff]
    %v186 = vld [vmem:[#allocation2 + $0x238] sm:$0xff]
    %v187 = vld [vmem:[#allocation2 + $0x240] sm:$0xff]
    %v188 = vld [vmem:[#allocation2 + $0x248] sm:$0xff]
    %v189 = vld [vmem:[#allocation2 + $0x250] sm:$0xff]
    %v190 = vld [vmem:[#allocation2 + $0x258] sm:$0xff]
    %v191 = vld [vmem:[#allocation2 + $0x260] sm:$0xff]
    %v192 = vld [vmem:[#allocation2 + $0x268] sm:$0xff]
    %v193 = vld [vmem:[#allocation2 + $0x270] sm:$0xff]
    %v194 = vld [vmem:[#allocation2 + $0x278] sm:$0xff]
    %v195 = vld [vmem:[#allocation2 + $0x280] sm:$0xff]
    %v196 = vld [vmem:[#allocation2 + $0x288] sm:$0xff]
    %v197 = vld [vmem:[#allocation2 + $0x290] sm:$0xff]
    %v198 = vld [vmem:[#allocation2 + $0x298] sm:$0xff]
    %v199 = vld [vmem:[#allocation2 + $0x2a0] sm:$0xff]
    %v200 = vld [vmem:[#allocation2 + $0x2a8] sm:$0xff]
    %v201 = vld [vmem:[#allocation2 + $0x2b0] sm:$0xff]
    %v202 = vld [vmem:[#allocation2 + $0x2b8] sm:$0xff]
    %v203 = vld [vmem:[#allocation2 + $0x2c0] sm:$0xff]
    %v204 = vld [vmem:[#allocation2 + $0x2c8] sm:$0xff]
    %v205 = vld [vmem:[#allocation2 + $0x2d0] sm:$0xff]
    %v206 = vld [vmem:[#allocation2 + $0x2d8] sm:$0xff]
    %v207 = vld [vmem:[#allocation2 + $0x2e0] sm:$0xff]
    %v208 = vld [vmem:[#allocation2 + $0x2e8] sm:$0xff]
    %v209 = vld [vmem:[#allocation2 + $0x2f0] sm:$0xff]
    %v210 = vld [vmem:[#allocation2 + $0x2f8] sm:$0xff]
    %v211 = vld [vmem:[#allocation2 + $0x300] sm:$0xff]
    %v212 = vld [vmem:[#allocation2 + $0x308] sm:$0xff]
    %v213 = vld [vmem:[#allocation2 + $0x310] sm:$0xff]
    %v214 = vld [vmem:[#allocation2 + $0x318] sm:$0xff]
    %v215 = vld [vmem:[#allocation2 + $0x320] sm:$0xff]
    %v216 = vld [vmem:[#allocation2 + $0x328] sm:$0xff]
    %v217 = vld [vmem:[#allocation2 + $0x330] sm:$0xff]
    %v218 = vld [vmem:[#allocation2 + $0x338] sm:$0xff]
    %v219 = vld [vmem:[#allocation2 + $0x340] sm:$0xff]
    %v220 = vld [vmem:[#allocation2 + $0x348] sm:$0xff]
    %v221 = vld [vmem:[#allocation2 + $0x350] sm:$0xff]
    %v222 = vld [vmem:[#allocation2 + $0x358] sm:$0xff]
    %v223 = vld [vmem:[#allocation2 + $0x360] sm:$0xff]
    %v224 = vld [vmem:[#allocation2 + $0x368] sm:$0xff]
    %v225 = vld [vmem:[#allocation2 + $0x370] sm:$0xff]
    %v226 = vld [vmem:[#allocation2 + $0x378] sm:$0xff]
    %v227 = vld [vmem:[#allocation2 + $0x380] sm:$0xff]
    %v228 = vld [vmem:[#allocation2 + $0x388] sm:$0xff]
    %v229 = vld [vmem:[#allocation2 + $0x390] sm:$0xff]
    %v230 = vld [vmem:[#allocation2 + $0x398] sm:$0xff]
    %v231 = vld [vmem:[#allocation2 + $0x3a0] sm:$0xff]
    %v232 = vld [vmem:[#allocation2 + $0x3a8] sm:$0xff]
    %v233 = vld [vmem:[#allocation2 + $0x3b0] sm:$0xff]
    %v234 = vld [vmem:[#allocation2 + $0x3b8] sm:$0xff]
    %v235 = vld [vmem:[#allocation2 + $0x3c0] sm:$0xff]
    %v236 = vld [vmem:[#allocation2 + $0x3c8] sm:$0xff]
    %v237 = vld [vmem:[#allocation2 + $0x3d0] sm:$0xff]
    %v238 = vld [vmem:[#allocation2 + $0x3d8] sm:$0xff]
    %v239 = vld [vmem:[#allocation2 + $0x3e0] sm:$0xff]
    %v240 = vld [vmem:[#allocation2 + $0x3e8] sm:$0xff]
    %v241 = vld [vmem:[#allocation2 + $0x3f0] sm:$0xff]
    %v242 = vld [vmem:[#allocation2 + $0x3f8] sm:$0xff]
    %v245 = vunpack.c.l.s4 1983009808
    %v246 = vunpack.c.0.s8 %v245
    %v247 = vlaneseq
    %v248 = vshrl.u32 %v247, 7
    %v249 = vsub.s32 %v246, %v248
    %v250 = vrot.slane %v114, %v249
    %v251 = vcombine.high %v250, %v250
    %254 = vmatprep.subr.mxu0 %v176
    %255 = vmatpush1.msra.mxu0 %v175
    %256 = vmatprep.subr.mxu0 %v172
    %257 = vmatpush1.msra.mxu0 %v171
    %258 = vmatprep.subr.mxu0 %v168
    %259 = vmatpush1.msra.mxu0 %v167
    %260 = vmatprep.subr.mxu0 %v164
    %261 = vmatpush1.msra.mxu0 %v163
    %262 = vmatprep.subr.mxu0 %v160
    %263 = vmatpush1.msra.mxu0 %v159
    %264 = vmatprep.subr.mxu0 %v156
    %265 = vmatpush1.msra.mxu0 %v155
    %266 = vmatprep.subr.mxu0 %v152
    %267 = vmatpush1.msra.mxu0 %v151
    %268 = vmatprep.subr.mxu0 %v148
    %269 = vmatpush1.msra.mxu0 %v147
    %270 = vmatprep.subr.mxu0 %v144
    %271 = vmatpush1.msra.mxu0 %v143
    %272 = vmatprep.subr.mxu0 %v140
    %273 = vmatpush1.msra.mxu0 %v139
    %274 = vmatprep.subr.mxu0 %v136
    %275 = vmatpush1.msra.mxu0 %v135
    %276 = vmatprep.subr.mxu0 %v132
    %277 = vmatpush1.msra.mxu0 %v131
    %278 = vmatprep.subr.mxu0 %v128
    %279 = vmatpush1.msra.mxu0 %v127
    %280 = vmatprep.subr.mxu0 %v124
    %281 = vmatpush1.msra.mxu0 %v123
    %282 = vmatprep.subr.mxu0 %v120
    %283 = vmatpush1.msra.mxu0 %v119
    %284 = vmatprep.subr.mxu0 %v116
    %285 = vmatpush1.msra.mxu0 %v115
    %286 = vmatprep.subr.mxu0 %v240
    %287 = vmatpush2.msra.mxu0 %v239
    %288 = vmatprep.subr.mxu0 %v236
    %289 = vmatpush2.msra.mxu0 %v235
    %290 = vmatprep.subr.mxu0 %v232
    %291 = vmatpush2.msra.mxu0 %v231
    %292 = vmatprep.subr.mxu0 %v228
    %293 = vmatpush2.msra.mxu0 %v227
    %294 = vmatprep.subr.mxu0 %v224
    %295 = vmatpush2.msra.mxu0 %v223
    %296 = vmatprep.subr.mxu0 %v220
    %297 = vmatpush2.msra.mxu0 %v219
    %298 = vmatprep.subr.mxu0 %v216
    %299 = vmatpush2.msra.mxu0 %v215
    %300 = vmatprep.subr.mxu0 %v212
    %301 = vmatpush2.msra.mxu0 %v211
    %302 = vmatprep.subr.mxu0 %v208
    %303 = vmatpush2.msra.mxu0 %v207
    %304 = vmatprep.subr.mxu0 %v204
    %305 = vmatpush2.msra.mxu0 %v203
    %306 = vmatprep.subr.mxu0 %v200
    %307 = vmatpush2.msra.mxu0 %v199
    %308 = vmatprep.subr.mxu0 %v196
    %309 = vmatpush2.msra.mxu0 %v195
    %310 = vmatprep.subr.mxu0 %v192
    %311 = vmatpush2.msra.mxu0 %v191
    %312 = vmatprep.subr.mxu0 %v188
    %313 = vmatpush2.msra.mxu0 %v187
    %314 = vmatprep.subr.mxu0 %v184
    %315 = vmatpush2.msra.mxu0 %v183
    %316 = vmatprep.subr.mxu0 %v180
    %317 = vmatpush2.msra.mxu0 %v179
    %318 = vmatprep.mubr.f32.mxu0 %v251
    %319 = vmatmul.mubr.f32.gmra.mxu0 %v250
    %v320 = vpop.f32.mrf.mxu0
    %v321 = vadd.f32 0.0, %v320
    %v322 = vpop.f32.mrf.mxu0
    %v323 = vadd.f32 0.0, %v322
    %324 = vdwg.mxu0
    %325 = vmatprep.subr.mxu0 %v178
    %326 = vmatpush1.msra.mxu0 %v177
    %327 = vmatprep.subr.mxu0 %v174
    %328 = vmatpush1.msra.mxu0 %v173
    %329 = vmatprep.subr.mxu0 %v170
    %330 = vmatpush1.msra.mxu0 %v169
    %331 = vmatprep.subr.mxu0 %v166
    %332 = vmatpush1.msra.mxu0 %v165
    %333 = vmatprep.subr.mxu0 %v162
    %334 = vmatpush1.msra.mxu0 %v161
    %335 = vmatprep.subr.mxu0 %v158
    %336 = vmatpush1.msra.mxu0 %v157
    %337 = vmatprep.subr.mxu0 %v154
    %338 = vmatpush1.msra.mxu0 %v153
    %339 = vmatprep.subr.mxu0 %v150
    %340 = vmatpush1.msra.mxu0 %v149
    %341 = vmatprep.subr.mxu0 %v146
    %342 = vmatpush1.msra.mxu0 %v145
    %343 = vmatprep.subr.mxu0 %v142
    %344 = vmatpush1.msra.mxu0 %v141
    %345 = vmatprep.subr.mxu0 %v138
    %346 = vmatpush1.msra.mxu0 %v137
    %347 = vmatprep.subr.mxu0 %v134
    %348 = vmatpush1.msra.mxu0 %v133
    %349 = vmatprep.subr.mxu0 %v130
    %350 = vmatpush1.msra.mxu0 %v129
    %351 = vmatprep.subr.mxu0 %v126
    %352 = vmatpush1.msra.mxu0 %v125
    %353 = vmatprep.subr.mxu0 %v122
    %354 = vmatpush1.msra.mxu0 %v121
    %355 = vmatprep.subr.mxu0 %v118
    %356 = vmatpush1.msra.mxu0 %v117
    %357 = vmatprep.subr.mxu0 %v242
    %358 = vmatpush2.msra.mxu0 %v241
    %359 = vmatprep.subr.mxu0 %v238
    %360 = vmatpush2.msra.mxu0 %v237
    %361 = vmatprep.subr.mxu0 %v234
    %362 = vmatpush2.msra.mxu0 %v233
    %363 = vmatprep.subr.mxu0 %v230
    %364 = vmatpush2.msra.mxu0 %v229
    %365 = vmatprep.subr.mxu0 %v226
    %366 = vmatpush2.msra.mxu0 %v225
    %367 = vmatprep.subr.mxu0 %v222
    %368 = vmatpush2.msra.mxu0 %v221
    %369 = vmatprep.subr.mxu0 %v218
    %370 = vmatpush2.msra.mxu0 %v217
    %371 = vmatprep.subr.mxu0 %v214
    %372 = vmatpush2.msra.mxu0 %v213
    %373 = vmatprep.subr.mxu0 %v210
    %374 = vmatpush2.msra.mxu0 %v209
    %375 = vmatprep.subr.mxu0 %v206
    %376 = vmatpush2.msra.mxu0 %v205
    %377 = vmatprep.subr.mxu0 %v202
    %378 = vmatpush2.msra.mxu0 %v201
    %379 = vmatprep.subr.mxu0 %v198
    %380 = vmatpush2.msra.mxu0 %v197
    %381 = vmatprep.subr.mxu0 %v194
    %382 = vmatpush2.msra.mxu0 %v193
    %383 = vmatprep.subr.mxu0 %v190
    %384 = vmatpush2.msra.mxu0 %v189
    %385 = vmatprep.subr.mxu0 %v186
    %386 = vmatpush2.msra.mxu0 %v185
    %387 = vmatprep.subr.mxu0 %v182
    %388 = vmatpush2.msra.mxu0 %v181
    %389 = vmatprep.mubr.f32.mxu0 %v251
    %390 = vmatmul.mubr.f32.gmra.mxu0 %v250
    %v391 = vpop.f32.mrf.mxu0
    %v392 = vadd.f32 0.0, %v391
    %v393 = vpop.f32.mrf.mxu0
    %v394 = vadd.f32 0.0, %v393
    %395 = vdwg.mxu0
    %v396 = vmax.f32 %v321, %v323
    %v397 = vmax.f32 %v392, %v394
    %v398 = vmax.f32 %v396, %v397
    %v399 = vlaneseq
    %v400 = vshrl.u32 %v399, 7
    %v401 = vsub.s32 0, %v400
    %v402 = vrot.slane %v79, %v401
    %v403 = vadd.f32 %v398, %v402
    %v404 = vmax.f32 %v403, 0.0
    %vm405 = vcmask 1041408
    %v406 = vsel %vm405, %v404, 0.0
    %v407 = vrot.slane %v406, 4
    %v408 = vadd.f32 %v406, %v407
    %v409 = vrot.slane %v408, 2
    %v410 = vadd.f32 %v408, %v409
    %v411 = vrot.slane %v410, 1
    %v412 = vadd.f32 %v410, %v411
    %v413 = vmul.f32 %v404, %v404
    %v414 = vsel %vm405, %v413, 0.0
    %v415 = vrot.slane %v414, 4
    %v416 = vadd.f32 %v414, %v415
    %v417 = vrot.slane %v416, 2
    %v418 = vadd.f32 %v416, %v417
    %v419 = vrot.slane %v418, 1
    %v420 = vadd.f32 %v418, %v419
    %vm421 = vcmask 1040384
    %v422 = vsel %vm421, %v412, %v420
    %423 = vmatprep.subr.mxu0 0.0
    %424 = vmatpush1.msra.mxu0 %v96
    %425 = vmatprep.subr.mxu0 0.0
    %426 = vmatpush1.msra.mxu0 %v95
    %427 = vmatprep.subr.mxu0 0.0
    %428 = vmatpush1.msra.mxu0 %v94
    %429 = vmatprep.subr.mxu0 0.0
    %430 = vmatpush1.msra.mxu0 %v93
    %431 = vmatprep.subr.mxu0 0.0
    %432 = vmatpush1.msra.mxu0 %v92
    %433 = vmatprep.subr.mxu0 0.0
    %434 = vmatpush1.msra.mxu0 %v91
    %435 = vmatprep.subr.mxu0 0.0
    %436 = vmatpush1.msra.mxu0 %v90
    %437 = vmatprep.subr.mxu0 0.0
    %438 = vmatpush1.msra.mxu0 %v89
    %439 = vmatprep.subr.mxu0 0.0
    %440 = vmatpush1.msra.mxu0 %v88
    %441 = vmatprep.subr.mxu0 0.0
    %442 = vmatpush1.msra.mxu0 %v87
    %443 = vmatprep.subr.mxu0 0.0
    %444 = vmatpush1.msra.mxu0 %v86
    %445 = vmatprep.subr.mxu0 0.0
    %446 = vmatpush1.msra.mxu0 %v85
    %447 = vmatprep.subr.mxu0 0.0
    %448 = vmatpush1.msra.mxu0 %v84
    %449 = vmatprep.subr.mxu0 0.0
    %450 = vmatpush1.msra.mxu0 %v83
    %451 = vmatprep.subr.mxu0 0.0
    %452 = vmatpush1.msra.mxu0 %v82
    %453 = vmatprep.subr.mxu0 0.0
    %454 = vmatpush1.msra.mxu0 %v81
    %455 = vmatprep.subr.mxu0 0.0
    %456 = vmatpush2.msra.mxu0 0.0
    %457 = vmatprep.subr.mxu0 0.0
    %458 = vmatpush2.msra.mxu0 0.0
    %459 = vmatprep.subr.mxu0 0.0
    %460 = vmatpush2.msra.mxu0 0.0
    %461 = vmatprep.subr.mxu0 0.0
    %462 = vmatpush2.msra.mxu0 0.0
    %463 = vmatprep.subr.mxu0 0.0
    %464 = vmatpush2.msra.mxu0 0.0
    %465 = vmatprep.subr.mxu0 0.0
    %466 = vmatpush2.msra.mxu0 0.0
    %467 = vmatprep.subr.mxu0 0.0
    %468 = vmatpush2.msra.mxu0 0.0
    %469 = vmatprep.subr.mxu0 0.0
    %470 = vmatpush2.msra.mxu0 0.0
    %471 = vmatprep.subr.mxu0 0.0
    %472 = vmatpush2.msra.mxu0 0.0
    %473 = vmatprep.subr.mxu0 0.0
    %474 = vmatpush2.msra.mxu0 0.0
    %475 = vmatprep.subr.mxu0 0.0
    %476 = vmatpush2.msra.mxu0 0.0
    %477 = vmatprep.subr.mxu0 0.0
    %478 = vmatpush2.msra.mxu0 0.0
    %479 = vmatprep.subr.mxu0 0.0
    %480 = vmatpush2.msra.mxu0 0.0
    %481 = vmatprep.subr.mxu0 0.0
    %482 = vmatpush2.msra.mxu0 0.0
    %483 = vmatprep.subr.mxu0 0.0
    %484 = vmatpush2.msra.mxu0 0.0
    %485 = vmatprep.subr.mxu0 0.0
    %486 = vmatpush2.msra.mxu0 0.0
    %487 = vmatprep.mubr.f32.mxu0 0.0
    %488 = vmatmul.mubr.f32.gmra.mxu0 %v422
    %v489 = vpop.f32.mrf.mxu0
    %v490 = vadd.f32 0.0, %v489
    %v491 = vpop.f32.mrf.mxu0
    %492 = vdwg.mxu0
    %v493 = vrcp.pop 98.0
    %v494 = vmul.f32 %v490, %v493
    %v495 = vmul.f32 %v494, %v494
    %v497 = vrot.slane %v495, 7
    %v499 = vsub.f32 %v494, %v497
    %v500 = vmax.f32 %v499, 0.0
    %v501 = vadd.f32 %v500, 1e-05
    %v502 = vrsqrt.pop %v501
    %v503 = vmul.f32 %v79, %v502
    %v505 = vrot.slane %v503, 1
    %v507 = vmul.f32 %v494, %v505
    %v509 = vrot.slane %v507, 6
    %v511 = vsub.f32 %v79, %v509
    %v513 = vrot.slane %v511, 1
    %v515 = vsel %vm421, %v505, %v513
    %516 = vmatprep.subr.mxu0 0.0
    %517 = vmatpush1.msra.mxu0 %v113
    %518 = vmatprep.subr.mxu0 0.0
    %519 = vmatpush1.msra.mxu0 %v112
    %520 = vmatprep.subr.mxu0 0.0
    %521 = vmatpush1.msra.mxu0 %v111
    %522 = vmatprep.subr.mxu0 0.0
    %523 = vmatpush1.msra.mxu0 %v110
    %524 = vmatprep.subr.mxu0 0.0
    %525 = vmatpush1.msra.mxu0 %v109
    %526 = vmatprep.subr.mxu0 0.0
    %527 = vmatpush1.msra.mxu0 %v108
    %528 = vmatprep.subr.mxu0 0.0
    %529 = vmatpush1.msra.mxu0 %v107
    %530 = vmatprep.subr.mxu0 0.0
    %531 = vmatpush1.msra.mxu0 %v106
    %532 = vmatprep.subr.mxu0 0.0
    %533 = vmatpush1.msra.mxu0 %v105
    %534 = vmatprep.subr.mxu0 0.0
    %535 = vmatpush1.msra.mxu0 %v104
    %536 = vmatprep.subr.mxu0 0.0
    %537 = vmatpush1.msra.mxu0 %v103
    %538 = vmatprep.subr.mxu0 0.0
    %539 = vmatpush1.msra.mxu0 %v102
    %540 = vmatprep.subr.mxu0 0.0
    %541 = vmatpush1.msra.mxu0 %v101
    %542 = vmatprep.subr.mxu0 0.0
    %543 = vmatpush1.msra.mxu0 %v100
    %544 = vmatprep.subr.mxu0 0.0
    %545 = vmatpush1.msra.mxu0 %v99
    %546 = vmatprep.subr.mxu0 0.0
    %547 = vmatpush1.msra.mxu0 %v98
    %548 = vmatprep.subr.mxu0 0.0
    %549 = vmatpush2.msra.mxu0 0.0
    %550 = vmatprep.subr.mxu0 0.0
    %551 = vmatpush2.msra.mxu0 0.0
    %552 = vmatprep.subr.mxu0 0.0
    %553 = vmatpush2.msra.mxu0 0.0
    %554 = vmatprep.subr.mxu0 0.0
    %555 = vmatpush2.msra.mxu0 0.0
    %556 = vmatprep.subr.mxu0 0.0
    %557 = vmatpush2.msra.mxu0 0.0
    %558 = vmatprep.subr.mxu0 0.0
    %559 = vmatpush2.msra.mxu0 0.0
    %560 = vmatprep.subr.mxu0 0.0
    %561 = vmatpush2.msra.mxu0 0.0
    %562 = vmatprep.subr.mxu0 0.0
    %563 = vmatpush2.msra.mxu0 0.0
    %564 = vmatprep.subr.mxu0 0.0
    %565 = vmatpush2.msra.mxu0 0.0
    %566 = vmatprep.subr.mxu0 0.0
    %567 = vmatpush2.msra.mxu0 0.0
    %568 = vmatprep.subr.mxu0 0.0
    %569 = vmatpush2.msra.mxu0 0.0
    %570 = vmatprep.subr.mxu0 0.0
    %571 = vmatpush2.msra.mxu0 0.0
    %572 = vmatprep.subr.mxu0 0.0
    %573 = vmatpush2.msra.mxu0 0.0
    %574 = vmatprep.subr.mxu0 0.0
    %575 = vmatpush2.msra.mxu0 0.0
    %576 = vmatprep.subr.mxu0 0.0
    %577 = vmatpush2.msra.mxu0 0.0
    %578 = vmatprep.subr.mxu0 0.0
    %579 = vmatpush2.msra.mxu0 0.0
    %580 = vmatprep.mubr.f32.mxu0 0.0
    %581 = vmatmul.mubr.f32.gmra.mxu0 %v515
    %v582 = vpop.f32.mrf.mxu0
    %v583 = vadd.f32 0.0, %v582
    %v584 = vpop.f32.mrf.mxu0
    %585 = vdwg.mxu0
    %v586 = vlaneseq
    %v587 = vshrl.u32 %v586, 7
    %v588 = vsub.s32 0, %v587
    %v589 = vrot.slane %v583, %v588
    %v590 = vmul.f32 %v404, %v589
    %v591 = vlaneseq
    %v592 = vshrl.u32 %v591, 7
    %v593 = vsub.s32 1, %v592
    %v594 = vrot.slane %v583, %v593
    %v595 = vadd.f32 %v590, %v594
    %v596 = vld [vmem:[#allocation5] sm:$0xff]
    %v597 = vld [vmem:[#allocation5 + $0x8] sm:$0xff]
    %v598 = vld [vmem:[#allocation5 + $0x10] sm:$0xff]
    %v599 = vld [vmem:[#allocation5 + $0x18] sm:$0xff]
    %v600 = vld [vmem:[#allocation5 + $0x20] sm:$0xff]
    %v601 = vld [vmem:[#allocation5 + $0x28] sm:$0xff]
    %v602 = vld [vmem:[#allocation5 + $0x30] sm:$0xff]
    %v603 = vld [vmem:[#allocation5 + $0x38] sm:$0xff]
    %v604 = vld [vmem:[#allocation5 + $0x40] sm:$0xff]
    %v605 = vld [vmem:[#allocation5 + $0x48] sm:$0xff]
    %v606 = vld [vmem:[#allocation5 + $0x50] sm:$0xff]
    %v607 = vld [vmem:[#allocation5 + $0x58] sm:$0xff]
    %v608 = vld [vmem:[#allocation5 + $0x60] sm:$0xff]
    %v609 = vld [vmem:[#allocation5 + $0x68] sm:$0xff]
    %v610 = vld [vmem:[#allocation5 + $0x70] sm:$0xff]
    %v611 = vld [vmem:[#allocation5 + $0x78] sm:$0xff]
    %v612 = vld [vmem:[#allocation5 + $0x80] sm:$0xff]
    %v613 = vld [vmem:[#allocation5 + $0x88] sm:$0xff]
    %v614 = vld [vmem:[#allocation5 + $0x90] sm:$0xff]
    %v615 = vld [vmem:[#allocation5 + $0x98] sm:$0xff]
    %v616 = vld [vmem:[#allocation5 + $0xa0] sm:$0xff]
    %v617 = vld [vmem:[#allocation5 + $0xa8] sm:$0xff]
    %v618 = vld [vmem:[#allocation5 + $0xb0] sm:$0xff]
    %v619 = vld [vmem:[#allocation5 + $0xb8] sm:$0xff]
    %v620 = vld [vmem:[#allocation5 + $0xc0] sm:$0xff]
    %v621 = vld [vmem:[#allocation5 + $0xc8] sm:$0xff]
    %v622 = vld [vmem:[#allocation5 + $0xd0] sm:$0xff]
    %v623 = vld [vmem:[#allocation5 + $0xd8] sm:$0xff]
    %v624 = vld [vmem:[#allocation5 + $0xe0] sm:$0xff]
    %v625 = vld [vmem:[#allocation5 + $0xe8] sm:$0xff]
    %v626 = vld [vmem:[#allocation5 + $0xf0] sm:$0xff]
    %v627 = vld [vmem:[#allocation5 + $0xf8] sm:$0xff]
    %v628 = vld [vmem:[#allocation5 + $0x100] sm:$0xff]
    %v629 = vld [vmem:[#allocation5 + $0x108] sm:$0xff]
    %v630 = vld [vmem:[#allocation5 + $0x110] sm:$0xff]
    %v631 = vld [vmem:[#allocation5 + $0x118] sm:$0xff]
    %v632 = vld [vmem:[#allocation5 + $0x120] sm:$0xff]
    %v633 = vld [vmem:[#allocation5 + $0x128] sm:$0xff]
    %v634 = vld [vmem:[#allocation5 + $0x130] sm:$0xff]
    %v635 = vld [vmem:[#allocation5 + $0x138] sm:$0xff]
    %v636 = vld [vmem:[#allocation5 + $0x140] sm:$0xff]
    %v637 = vld [vmem:[#allocation5 + $0x148] sm:$0xff]
    %v638 = vld [vmem:[#allocation5 + $0x150] sm:$0xff]
    %v639 = vld [vmem:[#allocation5 + $0x158] sm:$0xff]
    %v640 = vld [vmem:[#allocation5 + $0x160] sm:$0xff]
    %v641 = vld [vmem:[#allocation5 + $0x168] sm:$0xff]
    %v642 = vld [vmem:[#allocation5 + $0x170] sm:$0xff]
    %v643 = vld [vmem:[#allocation5 + $0x178] sm:$0xff]
    %v644 = vld [vmem:[#allocation5 + $0x180] sm:$0xff]
    %v645 = vld [vmem:[#allocation5 + $0x188] sm:$0xff]
    %v646 = vld [vmem:[#allocation5 + $0x190] sm:$0xff]
    %v647 = vld [vmem:[#allocation5 + $0x198] sm:$0xff]
    %v648 = vld [vmem:[#allocation5 + $0x1a0] sm:$0xff]
    %v649 = vld [vmem:[#allocation5 + $0x1a8] sm:$0xff]
    %v650 = vld [vmem:[#allocation5 + $0x1b0] sm:$0xff]
    %v651 = vld [vmem:[#allocation5 + $0x1b8] sm:$0xff]
    %v652 = vld [vmem:[#allocation5 + $0x1c0] sm:$0xff]
    %v653 = vld [vmem:[#allocation5 + $0x1c8] sm:$0xff]
    %v654 = vld [vmem:[#allocation5 + $0x1d0] sm:$0xff]
    %v655 = vld [vmem:[#allocation5 + $0x1d8] sm:$0xff]
    %v656 = vld [vmem:[#allocation5 + $0x1e0] sm:$0xff]
    %v657 = vld [vmem:[#allocation5 + $0x1e8] sm:$0xff]
    %v658 = vld [vmem:[#allocation5 + $0x1f0] sm:$0xff]
    %v659 = vld [vmem:[#allocation5 + $0x1f8] sm:$0xff]
    %660 = vmatprep.subr.mxu0 %v657
    %661 = vmatpush1.msra.mxu0 %v656
    %662 = vmatprep.subr.mxu0 %v653
    %663 = vmatpush1.msra.mxu0 %v652
    %664 = vmatprep.subr.mxu0 %v649
    %665 = vmatpush1.msra.mxu0 %v648
    %666 = vmatprep.subr.mxu0 %v645
    %667 = vmatpush1.msra.mxu0 %v644
    %668 = vmatprep.subr.mxu0 %v641
    %669 = vmatpush1.msra.mxu0 %v640
    %670 = vmatprep.subr.mxu0 %v637
    %671 = vmatpush1.msra.mxu0 %v636
    %672 = vmatprep.subr.mxu0 %v633
    %673 = vmatpush1.msra.mxu0 %v632
    %674 = vmatprep.subr.mxu0 %v629
    %675 = vmatpush1.msra.mxu0 %v628
    %676 = vmatprep.subr.mxu0 %v625
    %677 = vmatpush1.msra.mxu0 %v624
    %678 = vmatprep.subr.mxu0 %v621
    %679 = vmatpush1.msra.mxu0 %v620
    %680 = vmatprep.subr.mxu0 %v617
    %681 = vmatpush1.msra.mxu0 %v616
    %682 = vmatprep.subr.mxu0 %v613
    %683 = vmatpush1.msra.mxu0 %v612
    %684 = vmatprep.subr.mxu0 %v609
    %685 = vmatpush1.msra.mxu0 %v608
    %686 = vmatprep.subr.mxu0 %v605
    %687 = vmatpush1.msra.mxu0 %v604
    %688 = vmatprep.subr.mxu0 %v601
    %689 = vmatpush1.msra.mxu0 %v600
    %690 = vmatprep.subr.mxu0 %v597
    %691 = vmatpush1.msra.mxu0 %v596
    %692 = vmatprep.subr.mxu0 0.0
    %693 = vmatpush2.msra.mxu0 0.0
    %694 = vmatprep.subr.mxu0 0.0
    %695 = vmatpush2.msra.mxu0 0.0
    %696 = vmatprep.subr.mxu0 0.0
    %697 = vmatpush2.msra.mxu0 0.0
    %698 = vmatprep.subr.mxu0 0.0
    %699 = vmatpush2.msra.mxu0 0.0
    %700 = vmatprep.subr.mxu0 0.0
    %701 = vmatpush2.msra.mxu0 0.0
    %702 = vmatprep.subr.mxu0 0.0
    %703 = vmatpush2.msra.mxu0 0.0
    %704 = vmatprep.subr.mxu0 0.0
    %705 = vmatpush2.msra.mxu0 0.0
    %706 = vmatprep.subr.mxu0 0.0
    %707 = vmatpush2.msra.mxu0 0.0
    %708 = vmatprep.subr.mxu0 0.0
    %709 = vmatpush2.msra.mxu0 0.0
    %710 = vmatprep.subr.mxu0 0.0
    %711 = vmatpush2.msra.mxu0 0.0
    %712 = vmatprep.subr.mxu0 0.0
    %713 = vmatpush2.msra.mxu0 0.0
    %714 = vmatprep.subr.mxu0 0.0
    %715 = vmatpush2.msra.mxu0 0.0
    %716 = vmatprep.subr.mxu0 0.0
    %717 = vmatpush2.msra.mxu0 0.0
    %718 = vmatprep.subr.mxu0 0.0
    %719 = vmatpush2.msra.mxu0 0.0
    %720 = vmatprep.subr.mxu0 0.0
    %721 = vmatpush2.msra.mxu0 0.0
    %722 = vmatprep.subr.mxu0 0.0
    %723 = vmatpush2.msra.mxu0 0.0
    %724 = vmatprep.mubr.f32.mxu0 0.0
    %725 = vmatmul.mubr.f32.gmra.mxu0 %v595
    %v726 = vpop.f32.mrf.mxu0
    %v727 = vadd.f32 0.0, %v726
    %v728 = vpop.f32.mrf.mxu0
    %v729 = vadd.f32 0.0, %v728
    %730 = vdwg.mxu0
    %731 = vmatprep.subr.mxu0 %v659
    %732 = vmatpush1.msra.mxu0 %v658
    %733 = vmatprep.subr.mxu0 %v655
    %734 = vmatpush1.msra.mxu0 %v654
    %735 = vmatprep.subr.mxu0 %v651
    %736 = vmatpush1.msra.mxu0 %v650
    %737 = vmatprep.subr.mxu0 %v647
    %738 = vmatpush1.msra.mxu0 %v646
    %739 = vmatprep.subr.mxu0 %v643
    %740 = vmatpush1.msra.mxu0 %v642
    %741 = vmatprep.subr.mxu0 %v639
    %742 = vmatpush1.msra.mxu0 %v638
    %743 = vmatprep.subr.mxu0 %v635
    %744 = vmatpush1.msra.mxu0 %v634
    %745 = vmatprep.subr.mxu0 %v631
    %746 = vmatpush1.msra.mxu0 %v630
    %747 = vmatprep.subr.mxu0 %v627
    %748 = vmatpush1.msra.mxu0 %v626
    %749 = vmatprep.subr.mxu0 %v623
    %750 = vmatpush1.msra.mxu0 %v622
    %751 = vmatprep.subr.mxu0 %v619
    %752 = vmatpush1.msra.mxu0 %v618
    %753 = vmatprep.subr.mxu0 %v615
    %754 = vmatpush1.msra.mxu0 %v614
    %755 = vmatprep.subr.mxu0 %v611
    %756 = vmatpush1.msra.mxu0 %v610
    %757 = vmatprep.subr.mxu0 %v607
    %758 = vmatpush1.msra.mxu0 %v606
    %759 = vmatprep.subr.mxu0 %v603
    %760 = vmatpush1.msra.mxu0 %v602
    %761 = vmatprep.subr.mxu0 %v599
    %762 = vmatpush1.msra.mxu0 %v598
    %763 = vmatprep.subr.mxu0 0.0
    %764 = vmatpush2.msra.mxu0 0.0
    %765 = vmatprep.subr.mxu0 0.0
    %766 = vmatpush2.msra.mxu0 0.0
    %767 = vmatprep.subr.mxu0 0.0
    %768 = vmatpush2.msra.mxu0 0.0
    %769 = vmatprep.subr.mxu0 0.0
    %770 = vmatpush2.msra.mxu0 0.0
    %771 = vmatprep.subr.mxu0 0.0
    %772 = vmatpush2.msra.mxu0 0.0
    %773 = vmatprep.subr.mxu0 0.0
    %774 = vmatpush2.msra.mxu0 0.0
    %775 = vmatprep.subr.mxu0 0.0
    %776 = vmatpush2.msra.mxu0 0.0
    %777 = vmatprep.subr.mxu0 0.0
    %778 = vmatpush2.msra.mxu0 0.0
    %779 = vmatprep.subr.mxu0 0.0
    %780 = vmatpush2.msra.mxu0 0.0
    %781 = vmatprep.subr.mxu0 0.0
    %782 = vmatpush2.msra.mxu0 0.0
    %783 = vmatprep.subr.mxu0 0.0
    %784 = vmatpush2.msra.mxu0 0.0
    %785 = vmatprep.subr.mxu0 0.0
    %786 = vmatpush2.msra.mxu0 0.0
    %787 = vmatprep.subr.mxu0 0.0
    %788 = vmatpush2.msra.mxu0 0.0
    %789 = vmatprep.subr.mxu0 0.0
    %790 = vmatpush2.msra.mxu0 0.0
    %791 = vmatprep.subr.mxu0 0.0
    %792 = vmatpush2.msra.mxu0 0.0
    %793 = vmatprep.subr.mxu0 0.0
    %794 = vmatpush2.msra.mxu0 0.0
    %795 = vmatprep.mubr.f32.mxu0 0.0
    %796 = vmatmul.mubr.f32.gmra.mxu0 %v595
    %v797 = vpop.f32.mrf.mxu0
    %v798 = vadd.f32 0.0, %v797
    %v799 = vpop.f32.mrf.mxu0
    %v800 = vadd.f32 0.0, %v799
    %801 = vdwg.mxu0
    %v802 = vmax.f32 %v727, %v729
    %v803 = vmax.f32 %v798, %v800
    %v804 = vmax.f32 %v802, %v803
    %v805 = vlaneseq
    %v806 = vshrl.u32 %v805, 7
    %v807 = vsub.s32 3, %v806
    %v808 = vrot.slane %v79, %v807
    %v809 = vadd.f32 %v804, %v808
    %v810 = vmax.f32 %v809, 0.0
    %v811 = vsel %vm405, %v810, 0.0
    %v812 = vrot.slane %v811, 4
    %v813 = vadd.f32 %v811, %v812
    %v814 = vrot.slane %v813, 2
    %v815 = vadd.f32 %v813, %v814
    %v816 = vrot.slane %v815, 1
    %v817 = vadd.f32 %v815, %v816
    %v818 = vmul.f32 %v810, %v810
    %v819 = vsel %vm405, %v818, 0.0
    %v820 = vrot.slane %v819, 4
    %v821 = vadd.f32 %v819, %v820
    %v822 = vrot.slane %v821, 2
    %v823 = vadd.f32 %v821, %v822
    %v824 = vrot.slane %v823, 1
    %v825 = vadd.f32 %v823, %v824
    %v826 = vsel %vm421, %v817, %v825
    %827 = vmatprep.subr.mxu0 0.0
    %828 = vmatpush1.msra.mxu0 %v96
    %829 = vmatprep.subr.mxu0 0.0
    %830 = vmatpush1.msra.mxu0 %v95
    %831 = vmatprep.subr.mxu0 0.0
    %832 = vmatpush1.msra.mxu0 %v94
    %833 = vmatprep.subr.mxu0 0.0
    %834 = vmatpush1.msra.mxu0 %v93
    %835 = vmatprep.subr.mxu0 0.0
    %836 = vmatpush1.msra.mxu0 %v92
    %837 = vmatprep.subr.mxu0 0.0
    %838 = vmatpush1.msra.mxu0 %v91
    %839 = vmatprep.subr.mxu0 0.0
    %840 = vmatpush1.msra.mxu0 %v90
    %841 = vmatprep.subr.mxu0 0.0
    %842 = vmatpush1.msra.mxu0 %v89
    %843 = vmatprep.subr.mxu0 0.0
    %844 = vmatpush1.msra.mxu0 %v88
    %845 = vmatprep.subr.mxu0 0.0
    %846 = vmatpush1.msra.mxu0 %v87
    %847 = vmatprep.subr.mxu0 0.0
    %848 = vmatpush1.msra.mxu0 %v86
    %849 = vmatprep.subr.mxu0 0.0
    %850 = vmatpush1.msra.mxu0 %v85
    %851 = vmatprep.subr.mxu0 0.0
    %852 = vmatpush1.msra.mxu0 %v84
    %853 = vmatprep.subr.mxu0 0.0
    %854 = vmatpush1.msra.mxu0 %v83
    %855 = vmatprep.subr.mxu0 0.0
    %856 = vmatpush1.msra.mxu0 %v82
    %857 = vmatprep.subr.mxu0 0.0
    %858 = vmatpush1.msra.mxu0 %v81
    %859 = vmatprep.subr.mxu0 0.0
    %860 = vmatpush2.msra.mxu0 0.0
    %861 = vmatprep.subr.mxu0 0.0
    %862 = vmatpush2.msra.mxu0 0.0
    %863 = vmatprep.subr.mxu0 0.0
    %864 = vmatpush2.msra.mxu0 0.0
    %865 = vmatprep.subr.mxu0 0.0
    %866 = vmatpush2.msra.mxu0 0.0
    %867 = vmatprep.subr.mxu0 0.0
    %868 = vmatpush2.msra.mxu0 0.0
    %869 = vmatprep.subr.mxu0 0.0
    %870 = vmatpush2.msra.mxu0 0.0
    %871 = vmatprep.subr.mxu0 0.0
    %872 = vmatpush2.msra.mxu0 0.0
    %873 = vmatprep.subr.mxu0 0.0
    %874 = vmatpush2.msra.mxu0 0.0
    %875 = vmatprep.subr.mxu0 0.0
    %876 = vmatpush2.msra.mxu0 0.0
    %877 = vmatprep.subr.mxu0 0.0
    %878 = vmatpush2.msra.mxu0 0.0
    %879 = vmatprep.subr.mxu0 0.0
    %880 = vmatpush2.msra.mxu0 0.0
    %881 = vmatprep.subr.mxu0 0.0
    %882 = vmatpush2.msra.mxu0 0.0
    %883 = vmatprep.subr.mxu0 0.0
    %884 = vmatpush2.msra.mxu0 0.0
    %885 = vmatprep.subr.mxu0 0.0
    %886 = vmatpush2.msra.mxu0 0.0
    %887 = vmatprep.subr.mxu0 0.0
    %888 = vmatpush2.msra.mxu0 0.0
    %889 = vmatprep.subr.mxu0 0.0
    %890 = vmatpush2.msra.mxu0 0.0
    %891 = vmatprep.mubr.f32.mxu0 0.0
    %892 = vmatmul.mubr.f32.gmra.mxu0 %v826
    %v893 = vpop.f32.mrf.mxu0
    %v894 = vadd.f32 0.0, %v893
    %v895 = vpop.f32.mrf.mxu0
    %896 = vdwg.mxu0
    %v897 = vrcp.pop 18.0
    %v898 = vmul.f32 %v894, %v897
    %v899 = vmul.f32 %v898, %v898
    %v901 = vrot.slane %v899, 7
    %v903 = vsub.f32 %v898, %v901
    %v904 = vmax.f32 %v903, 0.0
    %v905 = vadd.f32 %v904, 1e-05
    %v906 = vrsqrt.pop %v905
    %v908 = vrot.slane %v906, 5
    %v910 = vmul.f32 %v79, %v908
    %v912 = vrot.slane %v910, 4
    %v914 = vmul.f32 %v898, %v912
    %v916 = vrot.slane %v914, 3
    %v918 = vsub.f32 %v79, %v916
    %v920 = vrot.slane %v918, 4
    %v922 = vsel %vm421, %v912, %v920
    %923 = vmatprep.subr.mxu0 0.0
    %924 = vmatpush1.msra.mxu0 %v113
    %925 = vmatprep.subr.mxu0 0.0
    %926 = vmatpush1.msra.mxu0 %v112
    %927 = vmatprep.subr.mxu0 0.0
    %928 = vmatpush1.msra.mxu0 %v111
    %929 = vmatprep.subr.mxu0 0.0
    %930 = vmatpush1.msra.mxu0 %v110
    %931 = vmatprep.subr.mxu0 0.0
    %932 = vmatpush1.msra.mxu0 %v109
    %933 = vmatprep.subr.mxu0 0.0
    %934 = vmatpush1.msra.mxu0 %v108
    %935 = vmatprep.subr.mxu0 0.0
    %936 = vmatpush1.msra.mxu0 %v107
    %937 = vmatprep.subr.mxu0 0.0
    %938 = vmatpush1.msra.mxu0 %v106
    %939 = vmatprep.subr.mxu0 0.0
    %940 = vmatpush1.msra.mxu0 %v105
    %941 = vmatprep.subr.mxu0 0.0
    %942 = vmatpush1.msra.mxu0 %v104
    %943 = vmatprep.subr.mxu0 0.0
    %944 = vmatpush1.msra.mxu0 %v103
    %945 = vmatprep.subr.mxu0 0.0
    %946 = vmatpush1.msra.mxu0 %v102
    %947 = vmatprep.subr.mxu0 0.0
    %948 = vmatpush1.msra.mxu0 %v101
    %949 = vmatprep.subr.mxu0 0.0
    %950 = vmatpush1.msra.mxu0 %v100
    %951 = vmatprep.subr.mxu0 0.0
    %952 = vmatpush1.msra.mxu0 %v99
    %953 = vmatprep.subr.mxu0 0.0
    %954 = vmatpush1.msra.mxu0 %v98
    %955 = vmatprep.subr.mxu0 0.0
    %956 = vmatpush2.msra.mxu0 0.0
    %957 = vmatprep.subr.mxu0 0.0
    %958 = vmatpush2.msra.mxu0 0.0
    %959 = vmatprep.subr.mxu0 0.0
    %960 = vmatpush2.msra.mxu0 0.0
    %961 = vmatprep.subr.mxu0 0.0
    %962 = vmatpush2.msra.mxu0 0.0
    %963 = vmatprep.subr.mxu0 0.0
    %964 = vmatpush2.msra.mxu0 0.0
    %965 = vmatprep.subr.mxu0 0.0
    %966 = vmatpush2.msra.mxu0 0.0
    %967 = vmatprep.subr.mxu0 0.0
    %968 = vmatpush2.msra.mxu0 0.0
    %969 = vmatprep.subr.mxu0 0.0
    %970 = vmatpush2.msra.mxu0 0.0
    %971 = vmatprep.subr.mxu0 0.0
    %972 = vmatpush2.msra.mxu0 0.0
    %973 = vmatprep.subr.mxu0 0.0
    %974 = vmatpush2.msra.mxu0 0.0
    %975 = vmatprep.subr.mxu0 0.0
    %976 = vmatpush2.msra.mxu0 0.0
    %977 = vmatprep.subr.mxu0 0.0
    %978 = vmatpush2.msra.mxu0 0.0
    %979 = vmatprep.subr.mxu0 0.0
    %980 = vmatpush2.msra.mxu0 0.0
    %981 = vmatprep.subr.mxu0 0.0
    %982 = vmatpush2.msra.mxu0 0.0
    %983 = vmatprep.subr.mxu0 0.0
    %984 = vmatpush2.msra.mxu0 0.0
    %985 = vmatprep.subr.mxu0 0.0
    %986 = vmatpush2.msra.mxu0 0.0
    %987 = vmatprep.mubr.f32.mxu0 0.0
    %988 = vmatmul.mubr.f32.gmra.mxu0 %v922
    %v989 = vpop.f32.mrf.mxu0
    %v990 = vadd.f32 0.0, %v989
    %v991 = vpop.f32.mrf.mxu0
    %992 = vdwg.mxu0
    %v993 = vlaneseq
    %v994 = vshrl.u32 %v993, 7
    %v995 = vsub.s32 0, %v994
    %v996 = vrot.slane %v990, %v995
    %v997 = vmul.f32 %v810, %v996
    %v998 = vlaneseq
    %v999 = vshrl.u32 %v998, 7
    %v1000 = vsub.s32 1, %v999
    %v1001 = vrot.slane %v990, %v1000
    %v1002 = vadd.f32 %v997, %v1001
    %v1003 = vld [vmem:[#allocation7] sm:$0xff]
    %v1004 = vld [vmem:[#allocation7 + $0x8] sm:$0xff]
    %v1005 = vld [vmem:[#allocation7 + $0x10] sm:$0xff]
    %v1006 = vld [vmem:[#allocation7 + $0x18] sm:$0xff]
    %v1007 = vld [vmem:[#allocation7 + $0x20] sm:$0xff]
    %v1008 = vld [vmem:[#allocation7 + $0x28] sm:$0xff]
    %v1009 = vld [vmem:[#allocation7 + $0x30] sm:$0xff]
    %v1010 = vld [vmem:[#allocation7 + $0x38] sm:$0xff]
    %v1011 = vld [vmem:[#allocation7 + $0x40] sm:$0xff]
    %v1012 = vld [vmem:[#allocation7 + $0x48] sm:$0xff]
    %v1013 = vld [vmem:[#allocation7 + $0x50] sm:$0xff]
    %v1014 = vld [vmem:[#allocation7 + $0x58] sm:$0xff]
    %v1015 = vld [vmem:[#allocation7 + $0x60] sm:$0xff]
    %v1016 = vld [vmem:[#allocation7 + $0x68] sm:$0xff]
    %v1017 = vld [vmem:[#allocation7 + $0x70] sm:$0xff]
    %v1018 = vld [vmem:[#allocation7 + $0x78] sm:$0xff]
    %v1019 = vlaneseq
    %v1020 = vshrl.u32 %v1019, 7
    %v1021 = vsub.s32 6, %v1020
    %v1022 = vrot.slane %v79, %v1021
    %1023 = vmatprep.subr.mxu0 0.0
    %1024 = vmatpush1.msra.mxu0 %v1018
    %1025 = vmatprep.subr.mxu0 0.0
    %1026 = vmatpush1.msra.mxu0 %v1017
    %1027 = vmatprep.subr.mxu0 0.0
    %1028 = vmatpush1.msra.mxu0 %v1016
    %1029 = vmatprep.subr.mxu0 0.0
    %1030 = vmatpush1.msra.mxu0 %v1015
    %1031 = vmatprep.subr.mxu0 0.0
    %1032 = vmatpush1.msra.mxu0 %v1014
    %1033 = vmatprep.subr.mxu0 0.0
    %1034 = vmatpush1.msra.mxu0 %v1013
    %1035 = vmatprep.subr.mxu0 0.0
    %1036 = vmatpush1.msra.mxu0 %v1012
    %1037 = vmatprep.subr.mxu0 0.0
    %1038 = vmatpush1.msra.mxu0 %v1011
    %1039 = vmatprep.subr.mxu0 0.0
    %1040 = vmatpush1.msra.mxu0 %v1010
    %1041 = vmatprep.subr.mxu0 0.0
    %1042 = vmatpush1.msra.mxu0 %v1009
    %1043 = vmatprep.subr.mxu0 0.0
    %1044 = vmatpush1.msra.mxu0 %v1008
    %1045 = vmatprep.subr.mxu0 0.0
    %1046 = vmatpush1.msra.mxu0 %v1007
    %1047 = vmatprep.subr.mxu0 0.0
    %1048 = vmatpush1.msra.mxu0 %v1006
    %1049 = vmatprep.subr.mxu0 0.0
    %1050 = vmatpush1.msra.mxu0 %v1005
    %1051 = vmatprep.subr.mxu0 0.0
    %1052 = vmatpush1.msra.mxu0 %v1004
    %1053 = vmatprep.subr.mxu0 0.0
    %1054 = vmatpush1.msra.mxu0 %v1003
    %1055 = vmatprep.subr.mxu0 0.0
    %1056 = vmatpush2.msra.mxu0 0.0
    %1057 = vmatprep.subr.mxu0 0.0
    %1058 = vmatpush2.msra.mxu0 0.0
    %1059 = vmatprep.subr.mxu0 0.0
    %1060 = vmatpush2.msra.mxu0 0.0
    %1061 = vmatprep.subr.mxu0 0.0
    %1062 = vmatpush2.msra.mxu0 0.0
    %1063 = vmatprep.subr.mxu0 0.0
    %1064 = vmatpush2.msra.mxu0 0.0
    %1065 = vmatprep.subr.mxu0 0.0
    %1066 = vmatpush2.msra.mxu0 0.0
    %1067 = vmatprep.subr.mxu0 0.0
    %1068 = vmatpush2.msra.mxu0 0.0
    %1069 = vmatprep.subr.mxu0 0.0
    %1070 = vmatpush2.msra.mxu0 0.0
    %1071 = vmatprep.subr.mxu0 0.0
    %1072 = vmatpush2.msra.mxu0 0.0
    %1073 = vmatprep.subr.mxu0 0.0
    %1074 = vmatpush2.msra.mxu0 0.0
    %1075 = vmatprep.subr.mxu0 0.0
    %1076 = vmatpush2.msra.mxu0 0.0
    %1077 = vmatprep.subr.mxu0 0.0
    %1078 = vmatpush2.msra.mxu0 0.0
    %1079 = vmatprep.subr.mxu0 0.0
    %1080 = vmatpush2.msra.mxu0 0.0
    %1081 = vmatprep.subr.mxu0 0.0
    %1082 = vmatpush2.msra.mxu0 0.0
    %1083 = vmatprep.subr.mxu0 0.0
    %1084 = vmatpush2.msra.mxu0 0.0
    %1085 = vmatprep.subr.mxu0 0.0
    %1086 = vmatpush2.msra.mxu0 0.0
    %1087 = vmatprep.mubr.f32.mxu0 0.0
    %1088 = vmatmul.mubr.f32.gmra.mxu0 %v1002
    %v1089 = vpop.f32.mrf.mxu0
    %v1090 = vadd.f32 %v1022, %v1089
    %v1091 = vpop.f32.mrf.mxu0
    %1092 = vdwg.mxu0
    %v1093 = vmax.f32 %v1090, 0.0
    %v1094 = vsel %vm405, %v1093, 0.0
    %v1095 = vrot.slane %v1094, 4
    %v1096 = vadd.f32 %v1094, %v1095
    %v1097 = vrot.slane %v1096, 2
    %v1098 = vadd.f32 %v1096, %v1097
    %v1099 = vrot.slane %v1098, 1
    %v1100 = vadd.f32 %v1098, %v1099
    %v1101 = vrcp.pop 2.0
    %v1102 = vmul.f32 %v1100, %v1101
    %v1103 = vmul.f32 %v1093, %v1093
    %v1104 = vsel %vm405, %v1103, 0.0
    %v1105 = vrot.slane %v1104, 4
    %v1106 = vadd.f32 %v1104, %v1105
    %v1107 = vrot.slane %v1106, 2
    %v1108 = vadd.f32 %v1106, %v1107
    %v1109 = vrot.slane %v1108, 1
    %v1110 = vadd.f32 %v1108, %v1109
    %v1111 = vmul.f32 %v1110, %v1101
    %v1112 = vmul.f32 %v1102, %v1102
    %v1113 = vsub.f32 %v1111, %v1112
    %v1114 = vmax.f32 %v1113, 0.0
    %v1115 = vadd.f32 %v1114, 1e-05
    %v1116 = vrsqrt.pop %v1115
    %v1117 = vmul.f32 %v79, %v1116
    %v1118 = vlaneseq
    %v1119 = vshrl.u32 %v1118, 7
    %v1120 = vsub.s32 7, %v1119
    %v1121 = vrot.slane %v1117, %v1120
    %v1122 = vmul.f32 %v1093, %v1121
    %v1123 = vmul.f32 %v1102, %v1117
    %v1125 = vrot.slane %v1123, 7
    %v1127 = vsub.f32 %v80, %v1125
    %v1128 = vlaneseq
    %v1129 = vshrl.u32 %v1128, 7
    %v1130 = vsub.s32 0, %v1129
    %v1131 = vrot.slane %v1127, %v1130
    %v1132 = vadd.f32 %v1122, %v1131
    %s1133 = scalar_lea.vmem [#allocation7], 128
    %v1134 = vld [vmem:[%s1133] sm:$0xff]
    %v1135 = vld [vmem:[%s1133 + $0x8] sm:$0xff]
    %v1136 = vld [vmem:[%s1133 + $0x10] sm:$0xff]
    %v1137 = vld [vmem:[%s1133 + $0x18] sm:$0xff]
    %v1138 = vld [vmem:[%s1133 + $0x20] sm:$0xff]
    %v1139 = vld [vmem:[%s1133 + $0x28] sm:$0xff]
    %v1140 = vld [vmem:[%s1133 + $0x30] sm:$0xff]
    %v1141 = vld [vmem:[%s1133 + $0x38] sm:$0xff]
    %v1142 = vld [vmem:[%s1133 + $0x40] sm:$0xff]
    %v1143 = vld [vmem:[%s1133 + $0x48] sm:$0xff]
    %v1144 = vld [vmem:[%s1133 + $0x50] sm:$0xff]
    %v1145 = vld [vmem:[%s1133 + $0x58] sm:$0xff]
    %v1146 = vld [vmem:[%s1133 + $0x60] sm:$0xff]
    %v1147 = vld [vmem:[%s1133 + $0x68] sm:$0xff]
    %v1148 = vld [vmem:[%s1133 + $0x70] sm:$0xff]
    %v1149 = vld [vmem:[%s1133 + $0x78] sm:$0xff]
    %v1150 = vlaneseq
    %v1151 = vshrl.u32 %v1150, 7
    %v1152 = vsub.s32 1, %v1151
    %v1153 = vrot.slane %v80, %v1152
    %1154 = vmatprep.subr.mxu0 0.0
    %1155 = vmatpush1.msra.mxu0 %v1149
    %1156 = vmatprep.subr.mxu0 0.0
    %1157 = vmatpush1.msra.mxu0 %v1148
    %1158 = vmatprep.subr.mxu0 0.0
    %1159 = vmatpush1.msra.mxu0 %v1147
    %1160 = vmatprep.subr.mxu0 0.0
    %1161 = vmatpush1.msra.mxu0 %v1146
    %1162 = vmatprep.subr.mxu0 0.0
    %1163 = vmatpush1.msra.mxu0 %v1145
    %1164 = vmatprep.subr.mxu0 0.0
    %1165 = vmatpush1.msra.mxu0 %v1144
    %1166 = vmatprep.subr.mxu0 0.0
    %1167 = vmatpush1.msra.mxu0 %v1143
    %1168 = vmatprep.subr.mxu0 0.0
    %1169 = vmatpush1.msra.mxu0 %v1142
    %1170 = vmatprep.subr.mxu0 0.0
    %1171 = vmatpush1.msra.mxu0 %v1141
    %1172 = vmatprep.subr.mxu0 0.0
    %1173 = vmatpush1.msra.mxu0 %v1140
    %1174 = vmatprep.subr.mxu0 0.0
    %1175 = vmatpush1.msra.mxu0 %v1139
    %1176 = vmatprep.subr.mxu0 0.0
    %1177 = vmatpush1.msra.mxu0 %v1138
    %1178 = vmatprep.subr.mxu0 0.0
    %1179 = vmatpush1.msra.mxu0 %v1137
    %1180 = vmatprep.subr.mxu0 0.0
    %1181 = vmatpush1.msra.mxu0 %v1136
    %1182 = vmatprep.subr.mxu0 0.0
    %1183 = vmatpush1.msra.mxu0 %v1135
    %1184 = vmatprep.subr.mxu0 0.0
    %1185 = vmatpush1.msra.mxu0 %v1134
    %1186 = vmatprep.subr.mxu0 0.0
    %1187 = vmatpush2.msra.mxu0 0.0
    %1188 = vmatprep.subr.mxu0 0.0
    %1189 = vmatpush2.msra.mxu0 0.0
    %1190 = vmatprep.subr.mxu0 0.0
    %1191 = vmatpush2.msra.mxu0 0.0
    %1192 = vmatprep.subr.mxu0 0.0
    %1193 = vmatpush2.msra.mxu0 0.0
    %1194 = vmatprep.subr.mxu0 0.0
    %1195 = vmatpush2.msra.mxu0 0.0
    %1196 = vmatprep.subr.mxu0 0.0
    %1197 = vmatpush2.msra.mxu0 0.0
    %1198 = vmatprep.subr.mxu0 0.0
    %1199 = vmatpush2.msra.mxu0 0.0
    %1200 = vmatprep.subr.mxu0 0.0
    %1201 = vmatpush2.msra.mxu0 0.0
    %1202 = vmatprep.subr.mxu0 0.0
    %1203 = vmatpush2.msra.mxu0 0.0
    %1204 = vmatprep.subr.mxu0 0.0
    %1205 = vmatpush2.msra.mxu0 0.0
    %1206 = vmatprep.subr.mxu0 0.0
    %1207 = vmatpush2.msra.mxu0 0.0
    %1208 = vmatprep.subr.mxu0 0.0
    %1209 = vmatpush2.msra.mxu0 0.0
    %1210 = vmatprep.subr.mxu0 0.0
    %1211 = vmatpush2.msra.mxu0 0.0
    %1212 = vmatprep.subr.mxu0 0.0
    %1213 = vmatpush2.msra.mxu0 0.0
    %1214 = vmatprep.subr.mxu0 0.0
    %1215 = vmatpush2.msra.mxu0 0.0
    %1216 = vmatprep.subr.mxu0 0.0
    %1217 = vmatpush2.msra.mxu0 0.0
    %1218 = vmatprep.mubr.f32.mxu0 0.0
    %1219 = vmatmul.mubr.f32.gmra.mxu0 %v1132
    %v1220 = vpop.f32.mrf.mxu0
    %v1221 = vadd.f32 %v1153, %v1220
    %v1222 = vpop.f32.mrf.mxu0
    %1223 = vdwg.mxu0
    %v1224 = vmax.f32 %v1221, 0.0
    %v1225 = vsel %vm405, %v1224, 0.0
    %v1226 = vrot.slane %v1225, 4
    %v1227 = vadd.f32 %v1225, %v1226
    %v1228 = vrot.slane %v1227, 2
    %v1229 = vadd.f32 %v1227, %v1228
    %v1230 = vrot.slane %v1229, 1
    %v1231 = vadd.f32 %v1229, %v1230
    %v1232 = vmul.f32 %v1231, %v1101
    %v1233 = vmul.f32 %v1224, %v1224
    %v1234 = vsel %vm405, %v1233, 0.0
    %v1235 = vrot.slane %v1234, 4
    %v1236 = vadd.f32 %v1234, %v1235
    %v1237 = vrot.slane %v1236, 2
    %v1238 = vadd.f32 %v1236, %v1237
    %v1239 = vrot.slane %v1238, 1
    %v1240 = vadd.f32 %v1238, %v1239
    %v1241 = vmul.f32 %v1240, %v1101
    %v1242 = vmul.f32 %v1232, %v1232
    %v1243 = vsub.f32 %v1241, %v1242
    %v1244 = vmax.f32 %v1243, 0.0
    %v1245 = vadd.f32 %v1244, 1e-05
    %v1246 = vrsqrt.pop %v1245
    %v1247 = vmul.f32 %v80, %v1246
    %v1248 = vlaneseq
    %v1249 = vshrl.u32 %v1248, 7
    %v1250 = vsub.s32 2, %v1249
    %v1251 = vrot.slane %v1247, %v1250
    %v1252 = vmul.f32 %v1224, %v1251
    %v1253 = vmul.f32 %v1232, %v1247
    %v1255 = vrot.slane %v1253, 7
    %v1257 = vsub.f32 %v80, %v1255
    %v1258 = vlaneseq
    %v1259 = vshrl.u32 %v1258, 7
    %v1260 = vsub.s32 3, %v1259
    %v1261 = vrot.slane %v1257, %v1260
    %v1262 = vadd.f32 %v1252, %v1261
    %s1263 = scalar_lea.vmem [#allocation7], 256
    %v1264 = vld [vmem:[%s1263] sm:$0xff]
    %v1265 = vld [vmem:[%s1263 + $0x8] sm:$0xff]
    %v1266 = vld [vmem:[%s1263 + $0x10] sm:$0xff]
    %v1267 = vld [vmem:[%s1263 + $0x18] sm:$0xff]
    %v1268 = vld [vmem:[%s1263 + $0x20] sm:$0xff]
    %v1269 = vld [vmem:[%s1263 + $0x28] sm:$0xff]
    %v1270 = vld [vmem:[%s1263 + $0x30] sm:$0xff]
    %v1271 = vld [vmem:[%s1263 + $0x38] sm:$0xff]
    %v1272 = vld [vmem:[%s1263 + $0x40] sm:$0xff]
    %v1273 = vld [vmem:[%s1263 + $0x48] sm:$0xff]
    %v1274 = vld [vmem:[%s1263 + $0x50] sm:$0xff]
    %v1275 = vld [vmem:[%s1263 + $0x58] sm:$0xff]
    %v1276 = vld [vmem:[%s1263 + $0x60] sm:$0xff]
    %v1277 = vld [vmem:[%s1263 + $0x68] sm:$0xff]
    %v1278 = vld [vmem:[%s1263 + $0x70] sm:$0xff]
    %v1279 = vld [vmem:[%s1263 + $0x78] sm:$0xff]
    %v1280 = vlaneseq
    %v1281 = vshrl.u32 %v1280, 7
    %v1282 = vsub.s32 4, %v1281
    %v1283 = vrot.slane %v80, %v1282
    %1284 = vmatprep.subr.mxu0 0.0
    %1285 = vmatpush1.msra.mxu0 %v1279
    %1286 = vmatprep.subr.mxu0 0.0
    %1287 = vmatpush1.msra.mxu0 %v1278
    %1288 = vmatprep.subr.mxu0 0.0
    %1289 = vmatpush1.msra.mxu0 %v1277
    %1290 = vmatprep.subr.mxu0 0.0
    %1291 = vmatpush1.msra.mxu0 %v1276
    %1292 = vmatprep.subr.mxu0 0.0
    %1293 = vmatpush1.msra.mxu0 %v1275
    %1294 = vmatprep.subr.mxu0 0.0
    %1295 = vmatpush1.msra.mxu0 %v1274
    %1296 = vmatprep.subr.mxu0 0.0
    %1297 = vmatpush1.msra.mxu0 %v1273
    %1298 = vmatprep.subr.mxu0 0.0
    %1299 = vmatpush1.msra.mxu0 %v1272
    %1300 = vmatprep.subr.mxu0 0.0
    %1301 = vmatpush1.msra.mxu0 %v1271
    %1302 = vmatprep.subr.mxu0 0.0
    %1303 = vmatpush1.msra.mxu0 %v1270
    %1304 = vmatprep.subr.mxu0 0.0
    %1305 = vmatpush1.msra.mxu0 %v1269
    %1306 = vmatprep.subr.mxu0 0.0
    %1307 = vmatpush1.msra.mxu0 %v1268
    %1308 = vmatprep.subr.mxu0 0.0
    %1309 = vmatpush1.msra.mxu0 %v1267
    %1310 = vmatprep.subr.mxu0 0.0
    %1311 = vmatpush1.msra.mxu0 %v1266
    %1312 = vmatprep.subr.mxu0 0.0
    %1313 = vmatpush1.msra.mxu0 %v1265
    %1314 = vmatprep.subr.mxu0 0.0
    %1315 = vmatpush1.msra.mxu0 %v1264
    %1316 = vmatprep.subr.mxu0 0.0
    %1317 = vmatpush2.msra.mxu0 0.0
    %1318 = vmatprep.subr.mxu0 0.0
    %1319 = vmatpush2.msra.mxu0 0.0
    %1320 = vmatprep.subr.mxu0 0.0
    %1321 = vmatpush2.msra.mxu0 0.0
    %1322 = vmatprep.subr.mxu0 0.0
    %1323 = vmatpush2.msra.mxu0 0.0
    %1324 = vmatprep.subr.mxu0 0.0
    %1325 = vmatpush2.msra.mxu0 0.0
    %1326 = vmatprep.subr.mxu0 0.0
    %1327 = vmatpush2.msra.mxu0 0.0
    %1328 = vmatprep.subr.mxu0 0.0
    %1329 = vmatpush2.msra.mxu0 0.0
    %1330 = vmatprep.subr.mxu0 0.0
    %1331 = vmatpush2.msra.mxu0 0.0
    %1332 = vmatprep.subr.mxu0 0.0
    %1333 = vmatpush2.msra.mxu0 0.0
    %1334 = vmatprep.subr.mxu0 0.0
    %1335 = vmatpush2.msra.mxu0 0.0
    %1336 = vmatprep.subr.mxu0 0.0
    %1337 = vmatpush2.msra.mxu0 0.0
    %1338 = vmatprep.subr.mxu0 0.0
    %1339 = vmatpush2.msra.mxu0 0.0
    %1340 = vmatprep.subr.mxu0 0.0
    %1341 = vmatpush2.msra.mxu0 0.0
    %1342 = vmatprep.subr.mxu0 0.0
    %1343 = vmatpush2.msra.mxu0 0.0
    %1344 = vmatprep.subr.mxu0 0.0
    %1345 = vmatpush2.msra.mxu0 0.0
    %1346 = vmatprep.subr.mxu0 0.0
    %1347 = vmatpush2.msra.mxu0 0.0
    %1348 = vmatprep.mubr.f32.mxu0 0.0
    %1349 = vmatmul.mubr.f32.gmra.mxu0 %v1262
    %v1350 = vpop.f32.mrf.mxu0
    %v1351 = vadd.f32 %v1283, %v1350
    %v1352 = vpop.f32.mrf.mxu0
    %1353 = vdwg.mxu0
    %1354 = vst [vmem:[#allocation10] sm:$0x3] %v1351
    // Predicated region
    $region42: #{speech_recognition_net.1} parent=1 // pred_check
      _
    $region43: #{speech_recognition_net.1} parent=1 // pred_check_branch
      %1356 = sbr.rel (0) target = $region45
    $region44: #{speech_recognition_net.1} parent=1 // pred_region
      %s1358 = ssub.s32 32, 32
      %1359 = vsyncadd [#allocation4], %s1358
      %s1361 = sshll.u32 [#allocation10], 4
      %s1362 = int_to_ptr.vmem [resolvable:$true] %s1361
      %1364 = dma.vmem_to_hbm [thread:$0]  %s1362, 32, %s6, [#allocation4]
    $region45: #{speech_recognition_net.1} parent=1 // pred_fallthru
      _
    // Predicated region
    $region46: #{speech_recognition_net.1} parent=1 // pred_check
      _
    $region47: #{speech_recognition_net.1} parent=1 // pred_check_branch
      %1366 = sbr.rel (0) target = $region49
    $region48: #{speech_recognition_net.1} parent=1 // pred_region
      %1367 = dma.done [#allocation4], 32
    $region49: #{speech_recognition_net.1} parent=1 // pred_fallthru
      _
    %1368 = vsyncpa [#allocation3], 1
    %1369 = vsyncpa [#allocation6], 1
    %1370 = vsyncpa [#allocation9], 1
    %1371 = vsyncpa [#allocation4], 1

</llo_original>
